<compile_context>
chip_gen: v7x
topology: tpu7x:2x2x1
jax: 0.10.0
libtpu: 0.0.40
codegen_flags: <defaults>
</compile_context>

<pallas_src>
import math
from functools import partial

import jax
import jax.numpy as jnp
import numpy as np
from jax.experimental import pallas as pl
from jax.experimental.pallas import tpu as pltpu


_DEF_VMEM = 64 * 1024 * 1024  # conservative fallback (v7x-sized)


def _vmem_capacity_bytes():
    try:
        info = pltpu.get_tpu_info()
        return int(getattr(info, "vmem_capacity_bytes", _DEF_VMEM))
    except Exception:
        return _DEF_VMEM


def _pick_tile(n, usage_fn, budget, cap=1024):
    """Largest multiple-of-32 divisor of n (<= cap) whose VMEM estimate fits."""
    cands = [t for t in range(32, min(n, cap) + 1, 32) if n % t == 0]
    for t in sorted(cands, reverse=True):
        if usage_fn(t) <= budget:
            return t
    if cands:
        return cands[0]
    # TODO(synk): pad N (with masked rows) when it has no multiple-of-32
    # divisor instead of falling back to a full-N block.
    return n


# ---------------------------------------------------------------------------
# Kernel 1: node-level GAT (all heads fused) + fused semantic-score epilogue.
#   grid = (P, N // TILE_Q), p outer / q inner.
# ---------------------------------------------------------------------------
def _node_gat_kernel(alpha, nheads, nhid, tile_q, cdt, exact_recip,
                     x_ref, w_ref, wf1_ref, ws_ref, bs_ref, qs_ref, adj_ref,
                     out_ref, score_ref, h_scr, f2t_scr):
    HW = nheads * (nhid + 1)
    qi = pl.program_id(1)

    # Once per meta-path: one fused MXU call yields, per head, [h_h | 1]
    # (the exact all-ones column comes from the augmented x / bias row and
    # later turns the softmax row-sum into a free MXU column) plus f2 = h.a2.
    @pl.when(qi == 0)
    def _():
        hf = jnp.dot(x_ref[...], w_ref[...],
                     preferred_element_type=jnp.float32)             # (N, HW+H)
        h_scr[...] = hf[:, :HW].astype(h_scr.dtype)
        f2t_scr[...] = hf[:, HW:].T                                  # single (N,H)->(H,N) transpose
        score_ref[...] = jnp.zeros_like(score_ref)                   # semantic-score accumulator

    adj_ok = adj_ref[...].astype(jnp.int32) != 0                     # int8 mask -> bool
    r0 = pl.multiple_of(qi * tile_q, tile_q)
    x_q = x_ref[pl.ds(r0, tile_q), :]                                # (TQ, nfeat+1)
    # f1 for this query tile: tiny MXU dot instead of an (N, H) f32 scratch.
    f1_q = jnp.dot(x_q, wf1_ref[...], preferred_element_type=jnp.float32)   # (TQ, H)
    neg = jnp.float32(-9e15)

    heads = []
    for h in range(nheads):
        e = f1_q[:, h:h + 1] + f2t_scr[h:h + 1, :]                   # (TQ, N)
        e = jnp.maximum(e, alpha * e)                                # LeakyReLU (0 < alpha < 1)
        e = jnp.where(adj_ok, e, neg)                                # mask non-edges
        e = e - jnp.max(e, axis=1, keepdims=True)                    # stable softmax (f32)
        p = jnp.exp(e.astype(cdt))                                   # bf16 EUP on bf16 path
        # [numerator | row-sum] in a single MXU call (ones column folded in).
        hp = jnp.dot(p, h_scr[:, h * (nhid + 1):(h + 1) * (nhid + 1)],
                     preferred_element_type=jnp.float32)             # (TQ, nhid+1)
        denom = hp[:, nhid:nhid + 1]
        inv = (1.0 / denom) if exact_recip else pl.reciprocal(denom, approx=True)
        hp = hp[:, :nhid] * inv
        # ELU (concat=True); clamp the discarded branch so exp never overflows.
        heads.append(jnp.where(hp > 0, hp, jnp.exp(jnp.minimum(hp, 0.0)) - 1.0))
    tile = jnp.concatenate(heads, axis=1)                            # (TQ, HD) f32, lane-dense

    # Fused semantic-level score contribution of this tile (per meta-path).
    hsem = jnp.dot(tile.astype(cdt), ws_ref[...],
                   preferred_element_type=jnp.float32) + bs_ref[...]     # (TQ, shid)
    s = jnp.sum(jnp.tanh(hsem) * qs_ref[...], axis=1, keepdims=True)     # (TQ, 1)
    s = jnp.sum(s, axis=0, keepdims=True)                                # (1, 1)
    score_ref[...] = score_ref[...] + s

    out_ref[...] = tile.astype(out_ref.dtype)


# ---------------------------------------------------------------------------
# Kernel 2: semantic-level softmax-weighted sum over meta-paths (streaming).
#   grid = (N // TILE_S,)
# ---------------------------------------------------------------------------
def _semantic_combine_kernel(P, w_ref, meta_ref, out_ref):
    acc = w_ref[0] * meta_ref[0].astype(jnp.float32)
    for p in range(1, P):
        acc = acc + w_ref[p] * meta_ref[p].astype(jnp.float32)
    out_ref[...] = acc


# ---------------------------------------------------------------------------
# Wrapper.
# ---------------------------------------------------------------------------
def prepare_adj_mask(adjs):
    """(P, 1, N, N) or (P, N, N) adjacency -> compact int8 {0,1} mask.

    Call ONCE (e.g. at graph-construction time) so the big adjacency stream is
    1 byte/element and never re-materialized inside the forward.
    """
    a = adjs
    if a.ndim == 4:
        a = jnp.squeeze(a, 1)
    return (a > 0).astype(jnp.int8)


def hgat_forward(x, adj_mask, Wn, a1, a2, Ws, bs, qs, *, alpha,
                 compute_dtype=jnp.bfloat16, max_tile_q=None):
    x2 = jnp.squeeze(x, 0)                                    # (N, nfeat)
    P, H, nfeat, D = Wn.shape
    N = x2.shape[0]
    HD = H * D
    HW = H * (D + 1)
    shid = Ws.shape[1]
    cdt = jnp.dtype(compute_dtype)
    cdt_bytes = cdt.itemsize
    exact_recip = (cdt == jnp.dtype(jnp.float32))
    assert adj_mask.shape == (P, N, N)

    # --- fold everything into one per-path weight matrix --------------------
    # x_aug = [x | 1]; the constant-1 column produces EXACT all-ones output
    # columns so the softmax denominator comes out of the MXU for free.
    x_aug = jnp.concatenate([x2, jnp.ones((N, 1), x2.dtype)], axis=1)   # (N, nfeat+1)
    Wh = jnp.transpose(Wn, (0, 2, 1, 3))                                # (P, nfeat, H, D)
    Wh = jnp.pad(Wh, ((0, 0), (0, 1), (0, 0), (0, 0)))                  # bias row = 0
    ones_col = jnp.zeros((P, nfeat + 1, H, 1), Wn.dtype).at[:, nfeat, :, 0].set(1.0)
    W_heads = jnp.concatenate([Wh, ones_col], axis=-1).reshape(P, nfeat + 1, HW)
    Wf1 = jnp.pad(jnp.einsum('phfd,phod->pfh', Wn, a1), ((0, 0), (0, 1), (0, 0)))
    Wf2 = jnp.pad(jnp.einsum('phfd,phod->pfh', Wn, a2), ((0, 0), (0, 1), (0, 0)))
    W_cat = jnp.concatenate([W_heads, Wf2], axis=-1).astype(cdt)        # (P, nfeat+1, HW+H)
    Wf1c = Wf1.astype(cdt)                                              # (P, nfeat+1, H)
    Wsc = Ws.astype(cdt)
    xc = x_aug.astype(cdt)

    # --- chip-aware tiling ---------------------------------------------------
    cap = _vmem_capacity_bytes()
    budget = int(cap * 0.70)
    vmem_limit = int(cap * 0.90)

    def node_usage(tq):
        return (2 * tq * N * 1                          # adj tile (int8), double-buffered
                + 2 * tq * HD * cdt_bytes               # output tile, double-buffered
                + 2 * N * (nfeat + 1) * cdt_bytes       # resident x (+ second buffer)
                + 2 * (nfeat + 1) * (HW + 2 * H) * cdt_bytes
                + N * HW * cdt_bytes                    # h_scr
                + 8 * N * 4                             # f2t_scr (sublane padded)
                + (2 << 20))                            # misc headroom

    TQ = _pick_tile(N, node_usage, budget, cap=(max_tile_q or 1024))
    NQ = max(N // TQ, 1)

    node_out, scores = pl.pallas_call(
        partial(_node_gat_kernel, float(alpha), H, D, TQ, cdt, exact_recip),
        grid=(P, NQ),
        in_specs=[
            pl.BlockSpec((N, nfeat + 1), lambda p, q: (0, 0)),                # x_aug (resident)
            pl.BlockSpec((None, nfeat + 1, HW + H), lambda p, q: (p, 0, 0)),  # fused W per path
            pl.BlockSpec((None, nfeat + 1, H), lambda p, q: (p, 0, 0)),       # W.a1 per path
            pl.BlockSpec((HD, shid), lambda p, q: (0, 0)),                    # Ws
            pl.BlockSpec((1, shid), lambda p, q: (0, 0)),                     # bs
            pl.BlockSpec((1, shid), lambda p, q: (0, 0)),                     # qs
            pl.BlockSpec((None, TQ, N), lambda p, q: (p, q, 0)),              # adj row tile (int8)
        ],
        out_specs=[
            pl.BlockSpec((None, TQ, HD), lambda p, q: (p, q, 0)),             # node features
            pl.BlockSpec((None, 1, 128), lambda p, q: (p, 0, 0)),             # score accumulator
        ],
        out_shape=(
            jax.ShapeDtypeStruct((P, N, HD), cdt),
            jax.ShapeDtypeStruct((P, 1, 128), jnp.float32),
        ),
        scratch_shapes=[
            pltpu.VMEM((N, HW), cdt),            # per-head [h | 1] blocks, all key nodes
            pltpu.VMEM((H, N), jnp.float32),     # f2 per head (row-vector form)
        ],
        compiler_params=pltpu.CompilerParams(
            dimension_semantics=("parallel", "arbitrary"),
            vmem_limit_bytes=vmem_limit),
    )(xc, W_cat, Wf1c, Wsc, bs, qs, adj_mask)

    # Mean over N + softmax over the P meta-path scores (P scalars of glue).
    weights = jax.nn.softmax(scores[:, 0, 0] / jnp.float32(N))            # (P,) f32

    # ---- semantic level: softmax-weighted sum over paths, row-tiled --------
    def sem_usage(t):
        return 2 * t * HD * (P * cdt_bytes + 4) + (1 << 20)

    TS = _pick_tile(N, sem_usage, budget, cap=1024)

    out = pl.pallas_call(
        partial(_semantic_combine_kernel, P),
        grid=(max(N // TS, 1),),
        in_specs=[
            pl.BlockSpec(memory_space=pltpu.MemorySpace.SMEM),                # (P,) weights
            pl.BlockSpec((P, TS, HD), lambda q: (0, q, 0)),
        ],
        out_specs=pl.BlockSpec((TS, HD), lambda q: (q, 0)),
        out_shape=jax.ShapeDtypeStruct((N, HD), jnp.float32),
        compiler_params=pltpu.CompilerParams(
            dimension_semantics=("parallel",),
            vmem_limit_bytes=vmem_limit),
    )(weights, node_out)

    return out[None]                                            # (1, N, nheads*nhid)


# ---------------------------------------------------------------------------
# Pure-JAX reference (mirrors the PyTorch forward exactly).
# ---------------------------------------------------------------------------
def hgat_reference(x, adjs, Wn, a1, a2, Ws, bs, qs, *, alpha):
    hi = jax.lax.Precision.HIGHEST
    x2 = jnp.squeeze(x, 0)
    adj2 = jnp.squeeze(adjs, 1)
    P, nheads, nfeat, nhid = Wn.shape
    N = x2.shape[0]
    meta = []
    for p in range(P):
        heads = []
        for hd in range(nheads):
            h = jnp.dot(x2, Wn[p, hd], precision=hi)
            f1 = jnp.sum(h * a1[p, hd], axis=1, keepdims=True)
            f2 = jnp.sum(h * a2[p, hd], axis=1, keepdims=True)
            e = f1 + f2.T
            e = jnp.where(e > 0, e, alpha * e)
            e = jnp.where(adj2[p] > 0, e, -9e15)
            att = jax.nn.softmax(e, axis=1)
            hp = jnp.dot(att, h, precision=hi)
            heads.append(jax.nn.elu(hp))
        meta.append(jnp.concatenate(heads, axis=1))
    X = jnp.concatenate(meta, axis=0)                              # (P*N, F)
    hsem = jnp.tanh(jnp.dot(X, Ws, precision=hi) + bs)
    sc = jnp.dot(hsem, qs.T, precision=hi).reshape(P, N)
    satt = jax.nn.softmax(jnp.mean(sc, axis=1))
    out = jnp.sum(X.reshape(P, N, -1) * satt[:, None, None], axis=0)
    return out[None]


def _xavier(key, shape, fan_in, fan_out, gain=1.414):
    bound = gain * math.sqrt(6.0 / (fan_in + fan_out))
    return jax.random.uniform(key, shape, jnp.float32, -bound, bound)


if __name__ == "__main__":
    # Small shapes consistent with HGAT(nfeat, nhid, shid, alpha, nheads, P)
    N, nfeat, nhid, shid, nheads, P = 128, 32, 16, 16, 4, 2
    alpha = 0.2

    key = jax.random.PRNGKey(0)
    k_x, k_adj, k_w, k_a, k_ws, k_b, k_q = jax.random.split(key, 7)

    x = jax.random.normal(k_x, (1, N, nfeat), jnp.float32)
    adjs = (jax.random.uniform(k_adj, (P, 1, N, N)) > 0.5).astype(jnp.float32)
    eye = jnp.eye(N, dtype=jnp.float32)[None, None]
    adjs = jnp.maximum(adjs, eye)   # self-loops so every row has a neighbor

    # Node-level attention parameters (per meta-path, per head)
    Wn = _xavier(k_w, (P, nheads, nfeat, nhid), nfeat, nhid)
    a_full = _xavier(k_a, (P, nheads, 2 * nhid, 1), 2 * nhid, 1)
    a1 = a_full[:, :, :nhid, 0][:, :, None, :]    # (P, nheads, 1, nhid)
    a2 = a_full[:, :, nhid:, 0][:, :, None, :]    # (P, nheads, 1, nhid)

    # Semantic-level attention parameters
    F_dim = nhid * nheads
    Ws = _xavier(k_ws, (F_dim, shid), F_dim, shid)
    bs = _xavier(k_b, (1, shid), 1, shid)
    qs = _xavier(k_q, (1, shid), 1, shid)

    # Compact int8 adjacency mask, prepared ONCE outside the forward.
    adj_mask = prepare_adj_mask(adjs)

    ref = hgat_reference(x, adjs, Wn, a1, a2, Ws, bs, qs, alpha=alpha)

    # f32 MXU-operand path; small tile cap to exercise the multi-tile grid +
    # resident-scratch reuse + score accumulation across q steps.
    out_f32 = jax.block_until_ready(
        hgat_forward(x, adj_mask, Wn, a1, a2, Ws, bs, qs,
                     alpha=alpha, compute_dtype=jnp.float32, max_tile_q=32))
    np.testing.assert_allclose(np.asarray(out_f32), np.asarray(ref),
                               rtol=1e-2, atol=1e-2)

    # bf16 MXU-operand / bf16-exp path (f32 accumulation): bf16-appropriate check.
    out_bf16 = jax.block_until_ready(
        hgat_forward(x, adj_mask, Wn, a1, a2, Ws, bs, qs,
                     alpha=alpha, compute_dtype=jnp.bfloat16))
    np.testing.assert_allclose(np.asarray(out_bf16), np.asarray(ref),
                               rtol=6e-2, atol=6e-2)

    assert out_f32.shape == (1, N, F_dim) and out_bf16.shape == (1, N, F_dim)
    print("KERNEL_OK")
</pallas_src>

<mosaic_0001>
module attributes {stable_mosaic.version = 11 : i64} {
  func.func @_node_gat_kernel(%arg0: i32, %arg1: i32, %arg2: memref<128x33xf32, #tpu.memory_space<vmem>>, %arg3: memref<1x33x72xf32, #tpu.memory_space<vmem>>, %arg4: memref<1x33x4xf32, #tpu.memory_space<vmem>>, %arg5: memref<64x16xf32, #tpu.memory_space<vmem>>, %arg6: memref<1x16xf32, #tpu.memory_space<vmem>>, %arg7: memref<1x16xf32, #tpu.memory_space<vmem>>, %arg8: memref<1x32x128xi8, #tpu.memory_space<vmem>>, %arg9: memref<1x32x64xf32, #tpu.memory_space<vmem>>, %arg10: memref<1x1x128xf32, #tpu.memory_space<vmem>>, %arg11: memref<128x68xf32, #tpu.memory_space<vmem>>, %arg12: memref<4x128xf32, #tpu.memory_space<vmem>>) attributes {dimension_semantics = [#tpu.dimension_semantics<parallel>, #tpu.dimension_semantics<arbitrary>], iteration_bounds = array<i64: 2, 4>, scalar_prefetch = 0 : i64, scratch_operands = 2 : i64, tpu.core_type = #tpu.core_type<tc>, window_params = [{pipeline_mode = #tpu.pipeline_mode<synchronous>, transform_indices = @transform_0, window_bounds = array<i64: 128, 33>}, {transform_indices = @transform_1, window_bounds = array<i64: 1, 33, 72>}, {transform_indices = @transform_2, window_bounds = array<i64: 1, 33, 4>}, {pipeline_mode = #tpu.pipeline_mode<synchronous>, transform_indices = @transform_3, window_bounds = array<i64: 64, 16>}, {pipeline_mode = #tpu.pipeline_mode<synchronous>, transform_indices = @transform_4, window_bounds = array<i64: 1, 16>}, {pipeline_mode = #tpu.pipeline_mode<synchronous>, transform_indices = @transform_5, window_bounds = array<i64: 1, 16>}, {transform_indices = @transform_6, window_bounds = array<i64: 1, 32, 128>}, {transform_indices = @transform_7, window_bounds = array<i64: 1, 32, 64>}, {transform_indices = @transform_8, window_bounds = array<i64: 1, 1, 128>}]} {
    %c0_i32 = arith.constant 0 : i32
    %0 = arith.cmpi eq, %arg1, %c0_i32 : i32
    %1 = arith.extui %0 : i1 to i32
    %c0_i32_0 = arith.constant 0 : i32
    %2 = arith.cmpi ne, %1, %c0_i32_0 : i32
    scf.if %2 {
      %c0_68 = arith.constant 0 : index
      %c0_69 = arith.constant 0 : index
      %163 = vector.load %arg2[%c0_68, %c0_69] : memref<128x33xf32, #tpu.memory_space<vmem>>, vector<128x33xf32>
      %c0_70 = arith.constant 0 : index
      %c0_71 = arith.constant 0 : index
      %c0_72 = arith.constant 0 : index
      %164 = vector.load %arg3[%c0_70, %c0_71, %c0_72] : memref<1x33x72xf32, #tpu.memory_space<vmem>>, vector<1x33x72xf32>
      %165 = vector.shape_cast %164 : vector<1x33x72xf32> to vector<33x72xf32>
      %cst_73 = arith.constant dense<0.000000e+00> : vector<128x72xf32>
      %166 = tpu.matmul %163, %165, %cst_73 {dimension_numbers = #tpu.dot_dimension_numbers<[1], [0], [0], [1], [0, 0, 1, 1], [], []>} : vector<128x33xf32>, vector<33x72xf32>, vector<128x72xf32> -> vector<128x72xf32>
      %167 = vector.extract_strided_slice %166 {offsets = [0, 0], sizes = [128, 68], strides = [1, 1]} : vector<128x72xf32> to vector<128x68xf32>
      %c0_74 = arith.constant 0 : index
      %c0_75 = arith.constant 0 : index
      %168 = vector.load %arg11[%c0_74, %c0_75] : memref<128x68xf32, #tpu.memory_space<vmem>>, vector<128x68xf32>
      tpu.vector_store %arg11[%c0_74, %c0_75], %167 {strides = array<i32>} : memref<128x68xf32, #tpu.memory_space<vmem>>, vector<128x68xf32>,
      %169 = vector.extract_strided_slice %166 {offsets = [0, 68], sizes = [128, 4], strides = [1, 1]} : vector<128x72xf32> to vector<128x4xf32>
      %170 = tpu.transpose %169, [1, 0] : vector<128x4xf32> -> vector<4x128xf32>
      %c0_76 = arith.constant 0 : index
      %c0_77 = arith.constant 0 : index
      %171 = vector.load %arg12[%c0_76, %c0_77] : memref<4x128xf32, #tpu.memory_space<vmem>>, vector<4x128xf32>
      tpu.vector_store %arg12[%c0_76, %c0_77], %170 {strides = array<i32>} : memref<4x128xf32, #tpu.memory_space<vmem>>, vector<4x128xf32>,
      %cst_78 = arith.constant 0.000000e+00 : f32
      %172 = vector.broadcast %cst_78 : f32 to vector<1x128xf32>
      %c0_79 = arith.constant 0 : index
      %c0_80 = arith.constant 0 : index
      %c0_81 = arith.constant 0 : index
      %173 = vector.load %arg10[%c0_79, %c0_80, %c0_81] : memref<1x1x128xf32, #tpu.memory_space<vmem>>, vector<1x1x128xf32>
      %174 = vector.shape_cast %173 : vector<1x1x128xf32> to vector<1x128xf32>
      %175 = vector.shape_cast %172 : vector<1x128xf32> to vector<1x1x128xf32>
      tpu.vector_store %arg10[%c0_79, %c0_80, %c0_81], %175 {strides = array<i32>} : memref<1x1x128xf32, #tpu.memory_space<vmem>>, vector<1x1x128xf32>,
    } else {
    }
    %c0 = arith.constant 0 : index
    %c0_1 = arith.constant 0 : index
    %c0_2 = arith.constant 0 : index
    %3 = vector.load %arg8[%c0, %c0_1, %c0_2] : memref<1x32x128xi8, #tpu.memory_space<vmem>>, vector<1x32x128xi8>
    %4 = vector.shape_cast %3 : vector<1x32x128xi8> to vector<32x128xi8>
    %5 = arith.extsi %4 : vector<32x128xi8> to vector<32x128xi32>
    %c0_i32_3 = arith.constant 0 : i32
    %6 = vector.broadcast %c0_i32_3 : i32 to vector<32x128xi32>
    %7 = arith.cmpi ne, %5, %6 : vector<32x128xi32>
    %c32_i32 = arith.constant 32 : i32
    %8 = arith.muli %arg1, %c32_i32 : i32
    %9 = tpu.assume_multiple %8, 32 : i32
    %10 = arith.index_cast %9 : i32 to index
    %c0_4 = arith.constant 0 : index
    %11 = vector.load %arg2[%10, %c0_4] : memref<128x33xf32, #tpu.memory_space<vmem>>, vector<32x33xf32>
    %c0_5 = arith.constant 0 : index
    %c0_6 = arith.constant 0 : index
    %c0_7 = arith.constant 0 : index
    %12 = vector.load %arg4[%c0_5, %c0_6, %c0_7] : memref<1x33x4xf32, #tpu.memory_space<vmem>>, vector<1x33x4xf32>
    %13 = vector.shape_cast %12 : vector<1x33x4xf32> to vector<33x4xf32>
    %cst = arith.constant dense<0.000000e+00> : vector<32x4xf32>
    %14 = tpu.matmul %11, %13, %cst {dimension_numbers = #tpu.dot_dimension_numbers<[1], [0], [0], [1], [0, 0, 1, 1], [], []>} : vector<32x33xf32>, vector<33x4xf32>, vector<32x4xf32> -> vector<32x4xf32>
    %15 = vector.extract_strided_slice %14 {offsets = [0, 0], sizes = [32, 1], strides = [1, 1]} : vector<32x4xf32> to vector<32x1xf32>
    %c0_8 = arith.constant 0 : index
    %c0_9 = arith.constant 0 : index
    %16 = vector.load %arg12[%c0_8, %c0_9] : memref<4x128xf32, #tpu.memory_space<vmem>>, vector<1x128xf32>
    %17 = vector.broadcast %15 : vector<32x1xf32> to vector<32x128xf32>
    %18 = vector.broadcast %16 : vector<1x128xf32> to vector<32x128xf32>
    %19 = arith.addf %17, %18 : vector<32x128xf32>
    %cst_10 = arith.constant 2.000000e-01 : f32
    %20 = vector.broadcast %cst_10 : f32 to vector<32x128xf32>
    %21 = arith.mulf %20, %19 : vector<32x128xf32>
    %22 = arith.maximumf %19, %21 : vector<32x128xf32>
    %cst_11 = arith.constant -9.000000e+15 : f32
    %23 = vector.broadcast %cst_11 : f32 to vector<32x128xf32>
    %24 = arith.select %7, %22, %23 : vector<32x128xi1>, vector<32x128xf32>
    %cst_12 = arith.constant dense<0xFF800000> : vector<32xf32>
    %25 = vector.multi_reduction <maximumf>, %24, %cst_12 [1] : vector<32x128xf32> to vector<32xf32>
    %26 = vector.shape_cast %25 : vector<32xf32> to vector<32x1xf32>
    %27 = vector.broadcast %26 : vector<32x1xf32> to vector<32x128xf32>
    %28 = arith.subf %24, %27 : vector<32x128xf32>
    %29 = math.exp %28 : vector<32x128xf32>
    %c0_13 = arith.constant 0 : index
    %c0_14 = arith.constant 0 : index
    %30 = vector.load %arg11[%c0_13, %c0_14] : memref<128x68xf32, #tpu.memory_space<vmem>>, vector<128x17xf32>
    %cst_15 = arith.constant dense<0.000000e+00> : vector<32x17xf32>
    %31 = tpu.matmul %29, %30, %cst_15 {dimension_numbers = #tpu.dot_dimension_numbers<[1], [0], [0], [1], [0, 0, 1, 1], [], []>} : vector<32x128xf32>, vector<128x17xf32>, vector<32x17xf32> -> vector<32x17xf32>
    %32 = vector.extract_strided_slice %31 {offsets = [0, 16], sizes = [32, 1], strides = [1, 1]} : vector<32x17xf32> to vector<32x1xf32>
    %cst_16 = arith.constant 1.000000e+00 : f32
    %33 = vector.broadcast %cst_16 : f32 to vector<32x1xf32>
    %34 = arith.divf %33, %32 : vector<32x1xf32>
    %35 = vector.extract_strided_slice %31 {offsets = [0, 0], sizes = [32, 16], strides = [1, 1]} : vector<32x17xf32> to vector<32x16xf32>
    %36 = vector.broadcast %34 : vector<32x1xf32> to vector<32x16xf32>
    %37 = arith.mulf %35, %36 : vector<32x16xf32>
    %cst_17 = arith.constant 0.000000e+00 : f32
    %38 = vector.broadcast %cst_17 : f32 to vector<32x16xf32>
    %39 = arith.cmpf ogt, %37, %38 : vector<32x16xf32>
    %cst_18 = arith.constant 0.000000e+00 : f32
    %40 = vector.broadcast %cst_18 : f32 to vector<32x16xf32>
    %41 = arith.minimumf %37, %40 : vector<32x16xf32>
    %42 = math.exp %41 : vector<32x16xf32>
    %cst_19 = arith.constant 1.000000e+00 : f32
    %43 = vector.broadcast %cst_19 : f32 to vector<32x16xf32>
    %44 = arith.subf %42, %43 : vector<32x16xf32>
    %45 = arith.select %39, %37, %44 : vector<32x16xi1>, vector<32x16xf32>
    %46 = vector.extract_strided_slice %14 {offsets = [0, 1], sizes = [32, 1], strides = [1, 1]} : vector<32x4xf32> to vector<32x1xf32>
    %c1 = arith.constant 1 : index
    %c0_20 = arith.constant 0 : index
    %47 = vector.load %arg12[%c1, %c0_20] : memref<4x128xf32, #tpu.memory_space<vmem>>, vector<1x128xf32>
    %48 = vector.broadcast %46 : vector<32x1xf32> to vector<32x128xf32>
    %49 = vector.broadcast %47 : vector<1x128xf32> to vector<32x128xf32>
    %50 = arith.addf %48, %49 : vector<32x128xf32>
    %cst_21 = arith.constant 2.000000e-01 : f32
    %51 = vector.broadcast %cst_21 : f32 to vector<32x128xf32>
    %52 = arith.mulf %51, %50 : vector<32x128xf32>
    %53 = arith.maximumf %50, %52 : vector<32x128xf32>
    %cst_22 = arith.constant -9.000000e+15 : f32
    %54 = vector.broadcast %cst_22 : f32 to vector<32x128xf32>
    %55 = arith.select %7, %53, %54 : vector<32x128xi1>, vector<32x128xf32>
    %cst_23 = arith.constant dense<0xFF800000> : vector<32xf32>
    %56 = vector.multi_reduction <maximumf>, %55, %cst_23 [1] : vector<32x128xf32> to vector<32xf32>
    %57 = vector.shape_cast %56 : vector<32xf32> to vector<32x1xf32>
    %58 = vector.broadcast %57 : vector<32x1xf32> to vector<32x128xf32>
    %59 = arith.subf %55, %58 : vector<32x128xf32>
    %60 = math.exp %59 : vector<32x128xf32>
    %c0_24 = arith.constant 0 : index
    %c17 = arith.constant 17 : index
    %61 = vector.load %arg11[%c0_24, %c17] : memref<128x68xf32, #tpu.memory_space<vmem>>, vector<128x17xf32>
    %cst_25 = arith.constant dense<0.000000e+00> : vector<32x17xf32>
    %62 = tpu.matmul %60, %61, %cst_25 {dimension_numbers = #tpu.dot_dimension_numbers<[1], [0], [0], [1], [0, 0, 1, 1], [], []>} : vector<32x128xf32>, vector<128x17xf32>, vector<32x17xf32> -> vector<32x17xf32>
    %63 = vector.extract_strided_slice %62 {offsets = [0, 16], sizes = [32, 1], strides = [1, 1]} : vector<32x17xf32> to vector<32x1xf32>
    %cst_26 = arith.constant 1.000000e+00 : f32
    %64 = vector.broadcast %cst_26 : f32 to vector<32x1xf32>
    %65 = arith.divf %64, %63 : vector<32x1xf32>
    %66 = vector.extract_strided_slice %62 {offsets = [0, 0], sizes = [32, 16], strides = [1, 1]} : vector<32x17xf32> to vector<32x16xf32>
    %67 = vector.broadcast %65 : vector<32x1xf32> to vector<32x16xf32>
    %68 = arith.mulf %66, %67 : vector<32x16xf32>
    %cst_27 = arith.constant 0.000000e+00 : f32
    %69 = vector.broadcast %cst_27 : f32 to vector<32x16xf32>
    %70 = arith.cmpf ogt, %68, %69 : vector<32x16xf32>
    %cst_28 = arith.constant 0.000000e+00 : f32
    %71 = vector.broadcast %cst_28 : f32 to vector<32x16xf32>
    %72 = arith.minimumf %68, %71 : vector<32x16xf32>
    %73 = math.exp %72 : vector<32x16xf32>
    %cst_29 = arith.constant 1.000000e+00 : f32
    %74 = vector.broadcast %cst_29 : f32 to vector<32x16xf32>
    %75 = arith.subf %73, %74 : vector<32x16xf32>
    %76 = arith.select %70, %68, %75 : vector<32x16xi1>, vector<32x16xf32>
    %77 = vector.extract_strided_slice %14 {offsets = [0, 2], sizes = [32, 1], strides = [1, 1]} : vector<32x4xf32> to vector<32x1xf32>
    %c2 = arith.constant 2 : index
    %c0_30 = arith.constant 0 : index
    %78 = vector.load %arg12[%c2, %c0_30] : memref<4x128xf32, #tpu.memory_space<vmem>>, vector<1x128xf32>
    %79 = vector.broadcast %77 : vector<32x1xf32> to vector<32x128xf32>
    %80 = vector.broadcast %78 : vector<1x128xf32> to vector<32x128xf32>
    %81 = arith.addf %79, %80 : vector<32x128xf32>
    %cst_31 = arith.constant 2.000000e-01 : f32
    %82 = vector.broadcast %cst_31 : f32 to vector<32x128xf32>
    %83 = arith.mulf %82, %81 : vector<32x128xf32>
    %84 = arith.maximumf %81, %83 : vector<32x128xf32>
    %cst_32 = arith.constant -9.000000e+15 : f32
    %85 = vector.broadcast %cst_32 : f32 to vector<32x128xf32>
    %86 = arith.select %7, %84, %85 : vector<32x128xi1>, vector<32x128xf32>
    %cst_33 = arith.constant dense<0xFF800000> : vector<32xf32>
    %87 = vector.multi_reduction <maximumf>, %86, %cst_33 [1] : vector<32x128xf32> to vector<32xf32>
    %88 = vector.shape_cast %87 : vector<32xf32> to vector<32x1xf32>
    %89 = vector.broadcast %88 : vector<32x1xf32> to vector<32x128xf32>
    %90 = arith.subf %86, %89 : vector<32x128xf32>
    %91 = math.exp %90 : vector<32x128xf32>
    %c0_34 = arith.constant 0 : index
    %c34 = arith.constant 34 : index
    %92 = vector.load %arg11[%c0_34, %c34] : memref<128x68xf32, #tpu.memory_space<vmem>>, vector<128x17xf32>
    %cst_35 = arith.constant dense<0.000000e+00> : vector<32x17xf32>
    %93 = tpu.matmul %91, %92, %cst_35 {dimension_numbers = #tpu.dot_dimension_numbers<[1], [0], [0], [1], [0, 0, 1, 1], [], []>} : vector<32x128xf32>, vector<128x17xf32>, vector<32x17xf32> -> vector<32x17xf32>
    %94 = vector.extract_strided_slice %93 {offsets = [0, 16], sizes = [32, 1], strides = [1, 1]} : vector<32x17xf32> to vector<32x1xf32>
    %cst_36 = arith.constant 1.000000e+00 : f32
    %95 = vector.broadcast %cst_36 : f32 to vector<32x1xf32>
    %96 = arith.divf %95, %94 : vector<32x1xf32>
    %97 = vector.extract_strided_slice %93 {offsets = [0, 0], sizes = [32, 16], strides = [1, 1]} : vector<32x17xf32> to vector<32x16xf32>
    %98 = vector.broadcast %96 : vector<32x1xf32> to vector<32x16xf32>
    %99 = arith.mulf %97, %98 : vector<32x16xf32>
    %cst_37 = arith.constant 0.000000e+00 : f32
    %100 = vector.broadcast %cst_37 : f32 to vector<32x16xf32>
    %101 = arith.cmpf ogt, %99, %100 : vector<32x16xf32>
    %cst_38 = arith.constant 0.000000e+00 : f32
    %102 = vector.broadcast %cst_38 : f32 to vector<32x16xf32>
    %103 = arith.minimumf %99, %102 : vector<32x16xf32>
    %104 = math.exp %103 : vector<32x16xf32>
    %cst_39 = arith.constant 1.000000e+00 : f32
    %105 = vector.broadcast %cst_39 : f32 to vector<32x16xf32>
    %106 = arith.subf %104, %105 : vector<32x16xf32>
    %107 = arith.select %101, %99, %106 : vector<32x16xi1>, vector<32x16xf32>
    %108 = vector.extract_strided_slice %14 {offsets = [0, 3], sizes = [32, 1], strides = [1, 1]} : vector<32x4xf32> to vector<32x1xf32>
    %c3 = arith.constant 3 : index
    %c0_40 = arith.constant 0 : index
    %109 = vector.load %arg12[%c3, %c0_40] : memref<4x128xf32, #tpu.memory_space<vmem>>, vector<1x128xf32>
    %110 = vector.broadcast %108 : vector<32x1xf32> to vector<32x128xf32>
    %111 = vector.broadcast %109 : vector<1x128xf32> to vector<32x128xf32>
    %112 = arith.addf %110, %111 : vector<32x128xf32>
    %cst_41 = arith.constant 2.000000e-01 : f32
    %113 = vector.broadcast %cst_41 : f32 to vector<32x128xf32>
    %114 = arith.mulf %113, %112 : vector<32x128xf32>
    %115 = arith.maximumf %112, %114 : vector<32x128xf32>
    %cst_42 = arith.constant -9.000000e+15 : f32
    %116 = vector.broadcast %cst_42 : f32 to vector<32x128xf32>
    %117 = arith.select %7, %115, %116 : vector<32x128xi1>, vector<32x128xf32>
    %cst_43 = arith.constant dense<0xFF800000> : vector<32xf32>
    %118 = vector.multi_reduction <maximumf>, %117, %cst_43 [1] : vector<32x128xf32> to vector<32xf32>
    %119 = vector.shape_cast %118 : vector<32xf32> to vector<32x1xf32>
    %120 = vector.broadcast %119 : vector<32x1xf32> to vector<32x128xf32>
    %121 = arith.subf %117, %120 : vector<32x128xf32>
    %122 = math.exp %121 : vector<32x128xf32>
    %c0_44 = arith.constant 0 : index
    %c51 = arith.constant 51 : index
    %123 = vector.load %arg11[%c0_44, %c51] : memref<128x68xf32, #tpu.memory_space<vmem>>, vector<128x17xf32>
    %cst_45 = arith.constant dense<0.000000e+00> : vector<32x17xf32>
    %124 = tpu.matmul %122, %123, %cst_45 {dimension_numbers = #tpu.dot_dimension_numbers<[1], [0], [0], [1], [0, 0, 1, 1], [], []>} : vector<32x128xf32>, vector<128x17xf32>, vector<32x17xf32> -> vector<32x17xf32>
    %125 = vector.extract_strided_slice %124 {offsets = [0, 16], sizes = [32, 1], strides = [1, 1]} : vector<32x17xf32> to vector<32x1xf32>
    %cst_46 = arith.constant 1.000000e+00 : f32
    %126 = vector.broadcast %cst_46 : f32 to vector<32x1xf32>
    %127 = arith.divf %126, %125 : vector<32x1xf32>
    %128 = vector.extract_strided_slice %124 {offsets = [0, 0], sizes = [32, 16], strides = [1, 1]} : vector<32x17xf32> to vector<32x16xf32>
    %129 = vector.broadcast %127 : vector<32x1xf32> to vector<32x16xf32>
    %130 = arith.mulf %128, %129 : vector<32x16xf32>
    %cst_47 = arith.constant 0.000000e+00 : f32
    %131 = vector.broadcast %cst_47 : f32 to vector<32x16xf32>
    %132 = arith.cmpf ogt, %130, %131 : vector<32x16xf32>
    %cst_48 = arith.constant 0.000000e+00 : f32
    %133 = vector.broadcast %cst_48 : f32 to vector<32x16xf32>
    %134 = arith.minimumf %130, %133 : vector<32x16xf32>
    %135 = math.exp %134 : vector<32x16xf32>
    %cst_49 = arith.constant 1.000000e+00 : f32
    %136 = vector.broadcast %cst_49 : f32 to vector<32x16xf32>
    %137 = arith.subf %135, %136 : vector<32x16xf32>
    %138 = arith.select %132, %130, %137 : vector<32x16xi1>, vector<32x16xf32>
    %139 = tpu.concatenate %45, %76, %107, %138 in 1 : vector<32x16xf32>, vector<32x16xf32>, vector<32x16xf32>, vector<32x16xf32> -> vector<32x64xf32>
    %c0_50 = arith.constant 0 : index
    %c0_51 = arith.constant 0 : index
    %140 = vector.load %arg5[%c0_50, %c0_51] : memref<64x16xf32, #tpu.memory_space<vmem>>, vector<64x16xf32>
    %cst_52 = arith.constant dense<0.000000e+00> : vector<32x16xf32>
    %141 = tpu.matmul %139, %140, %cst_52 {dimension_numbers = #tpu.dot_dimension_numbers<[1], [0], [0], [1], [0, 0, 1, 1], [], []>} : vector<32x64xf32>, vector<64x16xf32>, vector<32x16xf32> -> vector<32x16xf32>
    %c0_53 = arith.constant 0 : index
    %c0_54 = arith.constant 0 : index
    %142 = vector.load %arg6[%c0_53, %c0_54] : memref<1x16xf32, #tpu.memory_space<vmem>>, vector<1x16xf32>
    %143 = vector.broadcast %142 : vector<1x16xf32> to vector<32x16xf32>
    %144 = arith.addf %141, %143 : vector<32x16xf32>
    %145 = math.tanh %144 : vector<32x16xf32>
    %c0_55 = arith.constant 0 : index
    %c0_56 = arith.constant 0 : index
    %146 = vector.load %arg7[%c0_55, %c0_56] : memref<1x16xf32, #tpu.memory_space<vmem>>, vector<1x16xf32>
    %147 = vector.broadcast %146 : vector<1x16xf32> to vector<32x16xf32>
    %148 = arith.mulf %145, %147 : vector<32x16xf32>
    %cst_57 = arith.constant dense<0.000000e+00> : vector<32xf32>
    %149 = vector.multi_reduction <add>, %148, %cst_57 [1] : vector<32x16xf32> to vector<32xf32>
    %150 = vector.shape_cast %149 : vector<32xf32> to vector<32x1xf32>
    %cst_58 = arith.constant dense<0.000000e+00> : vector<1xf32>
    %151 = vector.multi_reduction <add>, %150, %cst_58 [0] : vector<32x1xf32> to vector<1xf32>
    %152 = vector.shape_cast %151 : vector<1xf32> to vector<1x1xf32>
    %c0_59 = arith.constant 0 : index
    %c0_60 = arith.constant 0 : index
    %c0_61 = arith.constant 0 : index
    %153 = vector.load %arg10[%c0_59, %c0_60, %c0_61] : memref<1x1x128xf32, #tpu.memory_space<vmem>>, vector<1x1x128xf32>
    %154 = vector.shape_cast %153 : vector<1x1x128xf32> to vector<1x128xf32>
    %155 = vector.broadcast %152 : vector<1x1xf32> to vector<1x128xf32>
    %156 = arith.addf %154, %155 : vector<1x128xf32>
    %c0_62 = arith.constant 0 : index
    %c0_63 = arith.constant 0 : index
    %c0_64 = arith.constant 0 : index
    %157 = vector.load %arg10[%c0_62, %c0_63, %c0_64] : memref<1x1x128xf32, #tpu.memory_space<vmem>>, vector<1x1x128xf32>
    %158 = vector.shape_cast %157 : vector<1x1x128xf32> to vector<1x128xf32>
    %159 = vector.shape_cast %156 : vector<1x128xf32> to vector<1x1x128xf32>
    tpu.vector_store %arg10[%c0_62, %c0_63, %c0_64], %159 {strides = array<i32>} : memref<1x1x128xf32, #tpu.memory_space<vmem>>, vector<1x1x128xf32>,
    %c0_65 = arith.constant 0 : index
    %c0_66 = arith.constant 0 : index
    %c0_67 = arith.constant 0 : index
    %160 = vector.load %arg9[%c0_65, %c0_66, %c0_67] : memref<1x32x64xf32, #tpu.memory_space<vmem>>, vector<1x32x64xf32>
    %161 = vector.shape_cast %160 : vector<1x32x64xf32> to vector<32x64xf32>
    %162 = vector.shape_cast %139 : vector<32x64xf32> to vector<1x32x64xf32>
    tpu.vector_store %arg9[%c0_65, %c0_66, %c0_67], %162 {strides = array<i32>} : memref<1x32x64xf32, #tpu.memory_space<vmem>>, vector<1x32x64xf32>,
    return
  }
  func.func @transform_0(%arg0: i32, %arg1: i32) -> (i32, i32) {
    %c0_i32 = arith.constant 0 : i32
    %c0_i32_0 = arith.constant 0 : i32
    %c0_i32_1 = arith.constant 0 : i32
    return %c0_i32, %c0_i32_0 : i32, i32
  }
  func.func @transform_1(%arg0: i32, %arg1: i32) -> (i32, i32, i32) {
    %c0_i32 = arith.constant 0 : i32
    %c0_i32_0 = arith.constant 0 : i32
    %c0_i32_1 = arith.constant 0 : i32
    return %arg0, %c0_i32, %c0_i32_0 : i32, i32, i32
  }
  func.func @transform_2(%arg0: i32, %arg1: i32) -> (i32, i32, i32) {
    %c0_i32 = arith.constant 0 : i32
    %c0_i32_0 = arith.constant 0 : i32
    %c0_i32_1 = arith.constant 0 : i32
    return %arg0, %c0_i32, %c0_i32_0 : i32, i32, i32
  }
  func.func @transform_3(%arg0: i32, %arg1: i32) -> (i32, i32) {
    %c0_i32 = arith.constant 0 : i32
    %c0_i32_0 = arith.constant 0 : i32
    %c0_i32_1 = arith.constant 0 : i32
    return %c0_i32, %c0_i32_0 : i32, i32
  }
  func.func @transform_4(%arg0: i32, %arg1: i32) -> (i32, i32) {
    %c0_i32 = arith.constant 0 : i32
    %c0_i32_0 = arith.constant 0 : i32
    %c0_i32_1 = arith.constant 0 : i32
    return %c0_i32, %c0_i32_0 : i32, i32
  }
  func.func @transform_5(%arg0: i32, %arg1: i32) -> (i32, i32) {
    %c0_i32 = arith.constant 0 : i32
    %c0_i32_0 = arith.constant 0 : i32
    %c0_i32_1 = arith.constant 0 : i32
    return %c0_i32, %c0_i32_0 : i32, i32
  }
  func.func @transform_6(%arg0: i32, %arg1: i32) -> (i32, i32, i32) {
    %c0_i32 = arith.constant 0 : i32
    %c0_i32_0 = arith.constant 0 : i32
    return %arg0, %arg1, %c0_i32 : i32, i32, i32
  }
  func.func @transform_7(%arg0: i32, %arg1: i32) -> (i32, i32, i32) {
    %c0_i32 = arith.constant 0 : i32
    %c0_i32_0 = arith.constant 0 : i32
    return %arg0, %arg1, %c0_i32 : i32, i32, i32
  }
  func.func @transform_8(%arg0: i32, %arg1: i32) -> (i32, i32, i32) {
    %c0_i32 = arith.constant 0 : i32
    %c0_i32_0 = arith.constant 0 : i32
    %c0_i32_1 = arith.constant 0 : i32
    return %arg0, %c0_i32, %c0_i32_0 : i32, i32, i32
  }
}

</mosaic_0001>

<llo_original>
// kernel: tpu_custom_call.1
$region0: #{tpu_custom_call.1}
  #allocation0 [shape = 'u32[]', space=smem, size = 0x4, offset = 0x4, fixed_abs, tag = 'smem constant byte address 0x4 - core index']
  #allocation1 [shape = 'u32[144,128]{1,0:T(1,128)}', space=vmem, size = 0x12000, scoped, tag = 'internal scratch']
  #allocation2 [shape = 'f32[128,68]{1,0:T(8,128)}', space=vmem, size = 0x10000, scoped, tag = 'scratch operand']
  #allocation3 [shape = 'f32[4,128]{1,0:T(4,128)}', space=vmem, size = 0x800, scoped, tag = 'scratch operand']
  %s0 = inlined_call_operand.vmem [shape: f32[128,33], index: 0, kind: input, shape index: {}]
  %s1 = inlined_call_operand.vmem [shape: f32[2,33,72], index: 1, kind: input, shape index: {}]
  %s2 = inlined_call_operand.vmem [shape: f32[2,33,4], index: 2, kind: input, shape index: {}]
  %s3 = inlined_call_operand.vmem [shape: f32[64,16], index: 3, kind: input, shape index: {}]
  %s4 = inlined_call_operand.vmem [shape: f32[1,16], index: 4, kind: input, shape index: {}]
  %s5 = inlined_call_operand.vmem [shape: f32[1,16], index: 5, kind: input, shape index: {}]
  %s6 = inlined_call_operand.vmem [shape: s8[2,128,128], index: 6, kind: input, shape index: {}]
  %s7 = inlined_call_operand.vmem [shape: f32[2,128,64], index: 7, kind: output, shape index: {0}]
  %s8 = inlined_call_operand.hbm [shape: f32[2,1,128], index: 8, kind: output, shape index: {1}]
  %9 = xla_tuple %s7, %s8
  %s10 = sld [smem:[#allocation0]]
  $region73: #{tpu_custom_call.1} parent=0
    _
  %s12 = ssub.s32 1, %s10
  %s13 = scalar_select 0, %s12, %s10
  $region1: #{tpu_custom_call.1} parent=0
    #allocation4 [shape = 'u8[1024]{0}', space=vmem, size = 0x400, scoped, tag = 'output window, operand 1']
    #allocation5 [shape = 's32[2]{0}', space=sflag, size = 0x8, scoped, tag = 'scoped memory for tpu_custom_call.1']
    %14 = vsyncpa [#allocation5], 0
    %s15 = scalar_lea.sflag [#allocation5], 1
    %16 = vsyncpa %s15, 0
    loop: start=0, step=1, limit=10
    $region2: #{tpu_custom_call.1} parent=1 // loop_pre_header
      _
    $region3: #{tpu_custom_call.1} parent=1 // loop_header
      %s18 = sphi 0, %s22
      %p19 = scmp.ge.s32.totalorder %s18, 10
      %s25 = sphi 0, %s37
      %s26 = sphi 0, %s33
      %s27 = sphi 0, %s25
      %s28 = sphi 0, %s26
      %s29 = sphi 0, %s27
      %s30 = sphi 0, %s28
      %s38 = sphi 0, %s38
      %s40 = sphi 0, %s38
      %s41 = sphi 0, %s40
      %s55 = sphi 0, %s41
      %s61 = sphi 0, %s63
      %s64 = sphi 0, %s61
      %s65 = sphi 0, %s64
      %s81 = sphi 0, %s65
      %s87 = sphi 0, %s89
      %s90 = sphi 0, %s87
      %s91 = sphi 0, %s90
      %s107 = sphi 0, %s91
      %s111 = sphi 0, %s111
      %s113 = sphi 0, %s111
      %s114 = sphi 0, %s113
      %s128 = sphi 0, %s114
      %s132 = sphi 0, %s132
      %s134 = sphi 0, %s132
      %s135 = sphi 0, %s134
      %s149 = sphi 0, %s135
      %s153 = sphi 0, %s153
      %s155 = sphi 0, %s153
      %s156 = sphi 0, %s155
      %s170 = sphi 0, %s156
      %s178 = sphi 0, %s180
      %s181 = sphi 0, %s178
      %s182 = sphi 0, %s181
      %s198 = sphi 0, %s182
      %s206 = sphi 0, %s208
      %s209 = sphi 0, %s206
      %s210 = sphi 0, %s209
      %s226 = sphi 0, %s210
      %s232 = sphi 0, %s234
      %s235 = sphi 0, %s232
      %s236 = sphi 0, %s235
      %s252 = sphi 0, %s236
    $region4: #{tpu_custom_call.1} parent=1 // loop_header_branch
      %21 = sbr.rel (%p19) target = $region8
    $region5: #{tpu_custom_call.1} parent=1 // loop_body
      %s23 = ssub.s32 %s18, 1
      %s24 = ssub.s32 %s18, 2
      %s31 = sadd.s32 1, %s26
      %p32 = scmp.ge.s32.totalorder %s31, 4
      %s33 = scalar_select %p32, 0, %s31
      %s34 = sadd.s32 1, %s25
      %s35 = scalar_select %p32, %s34, %s25
      %p36 = scmp.ge.s32.totalorder %s35, 2
      %s37 = scalar_select %p36, 0, %s35
      %s39 = sadd.s32 %s38, 1
      %p42 = scmp.eq.s32.totalorder %s18, 7
      %p43 = scmp.ne.s32.totalorder %s38, %s40
      %p44 = scmp.eq.s32.totalorder %s18, 0
      %p45 = por %p43, %p44
      %p46 = scmp.ne.s32.totalorder %s38, %s40
      %p47 = scmp.eq.s32.totalorder %s23, 7
      %p48 = por %p46, %p47
      %p49 = scmp.ne.s32.totalorder %s40, %s41
      %p50 = scmp.eq.s32.totalorder %s23, 0
      %p51 = por %p49, %p50
      %p52 = scmp.ne.s32.totalorder %s40, %s41
      %p53 = scmp.eq.s32.totalorder %s24, 7
      %p54 = por %p52, %p53
      %p56 = scmp.ne.s32.totalorder %s41, %s55
      %p57 = scmp.eq.s32.totalorder %s24, 0
      %p58 = por %p56, %p57
      %s59 = ssub.s32 %s25, %s37
      %p60 = scmp.eq.s32.totalorder %s59, 0
      %s62 = sadd.s32 %s61, 1
      %s63 = scalar_select %p60, %s61, %s62
      %p66 = pneg %p60
      %p67 = scmp.eq.s32.totalorder %s18, 7
      %p68 = por %p66, %p67
      %p69 = scmp.ne.s32.totalorder %s61, %s64
      %p70 = scmp.eq.s32.totalorder %s18, 0
      %p71 = por %p69, %p70
      %p72 = scmp.ne.s32.totalorder %s61, %s64
      %p73 = scmp.eq.s32.totalorder %s23, 7
      %p74 = por %p72, %p73
      %p75 = scmp.ne.s32.totalorder %s64, %s65
      %p76 = scmp.eq.s32.totalorder %s23, 0
      %p77 = por %p75, %p76
      %p78 = scmp.ne.s32.totalorder %s64, %s65
      %p79 = scmp.eq.s32.totalorder %s24, 7
      %p80 = por %p78, %p79
      %p82 = scmp.ne.s32.totalorder %s65, %s81
      %p83 = scmp.eq.s32.totalorder %s24, 0
      %p84 = por %p82, %p83
      %s85 = ssub.s32 %s25, %s37
      %p86 = scmp.eq.s32.totalorder %s85, 0
      %s88 = sadd.s32 %s87, 1
      %s89 = scalar_select %p86, %s87, %s88
      %p92 = pneg %p86
      %p93 = scmp.eq.s32.totalorder %s18, 7
      %p94 = por %p92, %p93
      %p95 = scmp.ne.s32.totalorder %s87, %s90
      %p96 = scmp.eq.s32.totalorder %s18, 0
      %p97 = por %p95, %p96
      %p98 = scmp.ne.s32.totalorder %s87, %s90
      %p99 = scmp.eq.s32.totalorder %s23, 7
      %p100 = por %p98, %p99
      %p101 = scmp.ne.s32.totalorder %s90, %s91
      %p102 = scmp.eq.s32.totalorder %s23, 0
      %p103 = por %p101, %p102
      %p104 = scmp.ne.s32.totalorder %s90, %s91
      %p105 = scmp.eq.s32.totalorder %s24, 7
      %p106 = por %p104, %p105
      %p108 = scmp.ne.s32.totalorder %s91, %s107
      %p109 = scmp.eq.s32.totalorder %s24, 0
      %p110 = por %p108, %p109
      %s112 = sadd.s32 %s111, 1
      %p115 = scmp.eq.s32.totalorder %s18, 7
      %p116 = scmp.ne.s32.totalorder %s111, %s113
      %p117 = scmp.eq.s32.totalorder %s18, 0
      %p118 = por %p116, %p117
      %p119 = scmp.ne.s32.totalorder %s111, %s113
      %p120 = scmp.eq.s32.totalorder %s23, 7
      %p121 = por %p119, %p120
      %p122 = scmp.ne.s32.totalorder %s113, %s114
      %p123 = scmp.eq.s32.totalorder %s23, 0
      %p124 = por %p122, %p123
      %p125 = scmp.ne.s32.totalorder %s113, %s114
      %p126 = scmp.eq.s32.totalorder %s24, 7
      %p127 = por %p125, %p126
      %p129 = scmp.ne.s32.totalorder %s114, %s128
      %p130 = scmp.eq.s32.totalorder %s24, 0
      %p131 = por %p129, %p130
      %s133 = sadd.s32 %s132, 1
      %p136 = scmp.eq.s32.totalorder %s18, 7
      %p137 = scmp.ne.s32.totalorder %s132, %s134
      %p138 = scmp.eq.s32.totalorder %s18, 0
      %p139 = por %p137, %p138
      %p140 = scmp.ne.s32.totalorder %s132, %s134
      %p141 = scmp.eq.s32.totalorder %s23, 7
      %p142 = por %p140, %p141
      %p143 = scmp.ne.s32.totalorder %s134, %s135
      %p144 = scmp.eq.s32.totalorder %s23, 0
      %p145 = por %p143, %p144
      %p146 = scmp.ne.s32.totalorder %s134, %s135
      %p147 = scmp.eq.s32.totalorder %s24, 7
      %p148 = por %p146, %p147
      %p150 = scmp.ne.s32.totalorder %s135, %s149
      %p151 = scmp.eq.s32.totalorder %s24, 0
      %p152 = por %p150, %p151
      %s154 = sadd.s32 %s153, 1
      %p157 = scmp.eq.s32.totalorder %s18, 7
      %p158 = scmp.ne.s32.totalorder %s153, %s155
      %p159 = scmp.eq.s32.totalorder %s18, 0
      %p160 = por %p158, %p159
      %p161 = scmp.ne.s32.totalorder %s153, %s155
      %p162 = scmp.eq.s32.totalorder %s23, 7
      %p163 = por %p161, %p162
      %p164 = scmp.ne.s32.totalorder %s155, %s156
      %p165 = scmp.eq.s32.totalorder %s23, 0
      %p166 = por %p164, %p165
      %p167 = scmp.ne.s32.totalorder %s155, %s156
      %p168 = scmp.eq.s32.totalorder %s24, 7
      %p169 = por %p167, %p168
      %p171 = scmp.ne.s32.totalorder %s156, %s170
      %p172 = scmp.eq.s32.totalorder %s24, 0
      %p173 = por %p171, %p172
      %s174 = ssub.s32 %s25, %s37
      %s175 = ssub.s32 %s26, %s33
      %s176 = sor.u32 %s174, %s175
      %p177 = scmp.eq.s32.totalorder %s176, 0
      %s179 = sadd.s32 %s178, 1
      %s180 = scalar_select %p177, %s178, %s179
      %p183 = pneg %p177
      %p184 = scmp.eq.s32.totalorder %s18, 7
      %p185 = por %p183, %p184
      %p186 = scmp.ne.s32.totalorder %s178, %s181
      %p187 = scmp.eq.s32.totalorder %s18, 0
      %p188 = por %p186, %p187
      %p189 = scmp.ne.s32.totalorder %s178, %s181
      %p190 = scmp.eq.s32.totalorder %s23, 7
      %p191 = por %p189, %p190
      %p192 = scmp.ne.s32.totalorder %s181, %s182
      %p193 = scmp.eq.s32.totalorder %s23, 0
      %p194 = por %p192, %p193
      %p195 = scmp.ne.s32.totalorder %s181, %s182
      %p196 = scmp.eq.s32.totalorder %s24, 7
      %p197 = por %p195, %p196
      %p199 = scmp.ne.s32.totalorder %s182, %s198
      %p200 = scmp.eq.s32.totalorder %s24, 0
      %p201 = por %p199, %p200
      %s202 = ssub.s32 %s25, %s37
      %s203 = ssub.s32 %s26, %s33
      %s204 = sor.u32 %s202, %s203
      %p205 = scmp.eq.s32.totalorder %s204, 0
      %s207 = sadd.s32 %s206, 1
      %s208 = scalar_select %p205, %s206, %s207
      %p211 = pneg %p205
      %p212 = scmp.eq.s32.totalorder %s18, 7
      %p213 = por %p211, %p212
      %p214 = scmp.ne.s32.totalorder %s206, %s209
      %p215 = scmp.eq.s32.totalorder %s18, 0
      %p216 = por %p214, %p215
      %p217 = scmp.ne.s32.totalorder %s206, %s209
      %p218 = scmp.eq.s32.totalorder %s23, 7
      %p219 = por %p217, %p218
      %p220 = scmp.ne.s32.totalorder %s209, %s210
      %p221 = scmp.eq.s32.totalorder %s23, 0
      %p222 = por %p220, %p221
      %p223 = scmp.ne.s32.totalorder %s209, %s210
      %p224 = scmp.eq.s32.totalorder %s24, 7
      %p225 = por %p223, %p224
      %p227 = scmp.ne.s32.totalorder %s210, %s226
      %p228 = scmp.eq.s32.totalorder %s24, 0
      %p229 = por %p227, %p228
      %s230 = ssub.s32 %s25, %s37
      %p231 = scmp.eq.s32.totalorder %s230, 0
      %s233 = sadd.s32 %s232, 1
      %s234 = scalar_select %p231, %s232, %s233
      %p237 = pneg %p231
      %p238 = scmp.eq.s32.totalorder %s18, 7
      %p239 = por %p237, %p238
      %p240 = scmp.ne.s32.totalorder %s232, %s235
      %p241 = scmp.eq.s32.totalorder %s18, 0
      %p242 = por %p240, %p241
      %p243 = scmp.ne.s32.totalorder %s232, %s235
      %p244 = scmp.eq.s32.totalorder %s23, 7
      %p245 = por %p243, %p244
      %p246 = scmp.ne.s32.totalorder %s235, %s236
      %p247 = scmp.eq.s32.totalorder %s23, 0
      %p248 = por %p246, %p247
      %p249 = scmp.ne.s32.totalorder %s235, %s236
      %p250 = scmp.eq.s32.totalorder %s24, 7
      %p251 = por %p249, %p250
      %p253 = scmp.ne.s32.totalorder %s236, %s252
      %p254 = scmp.eq.s32.totalorder %s24, 0
      %p255 = por %p253, %p254
      %p256 = scmp.le.s32.totalorder 1, %s18
      %p257 = scmp.lt.s32.totalorder %s18, 9
      %p258 = pnand %p256, %p257
      %p259 = pneg %p258
      // Predicated region
      $region9: #{tpu_custom_call.1} parent=5 // pred_check
        _
      $region10: #{tpu_custom_call.1} parent=5 // pred_check_branch
        %261 = sbr.rel (%p258) target = $region12
      $region11: #{tpu_custom_call.1} parent=5 // pred_region
        %s262 = ssub.s32 %s18, 1
        // Predicated region
        $region13: #{tpu_custom_call.1} parent=11 // pred_check
          %p263 = pneg %p51
        $region14: #{tpu_custom_call.1} parent=11 // pred_check_branch
          %265 = sbr.rel (%p263) target = $region16
        $region15: #{tpu_custom_call.1} parent=11 // pred_region
          _
        $region16: #{tpu_custom_call.1} parent=11 // pred_fallthru
          _
        // Predicated region
        $region17: #{tpu_custom_call.1} parent=11 // pred_check
          %p266 = pneg %p124
        $region18: #{tpu_custom_call.1} parent=11 // pred_check_branch
          %268 = sbr.rel (%p266) target = $region20
        $region19: #{tpu_custom_call.1} parent=11 // pred_region
          _
        $region20: #{tpu_custom_call.1} parent=11 // pred_fallthru
          _
        // Predicated region
        $region21: #{tpu_custom_call.1} parent=11 // pred_check
          %p269 = pneg %p145
        $region22: #{tpu_custom_call.1} parent=11 // pred_check_branch
          %271 = sbr.rel (%p269) target = $region24
        $region23: #{tpu_custom_call.1} parent=11 // pred_region
          _
        $region24: #{tpu_custom_call.1} parent=11 // pred_fallthru
          _
        // Predicated region
        $region25: #{tpu_custom_call.1} parent=11 // pred_check
          %p272 = pneg %p166
        $region26: #{tpu_custom_call.1} parent=11 // pred_check_branch
          %274 = sbr.rel (%p272) target = $region28
        $region27: #{tpu_custom_call.1} parent=11 // pred_region
          _
        $region28: #{tpu_custom_call.1} parent=11 // pred_fallthru
          _
      $region12: #{tpu_custom_call.1} parent=5 // pred_fallthru
        _
      %p275 = scmp.lt.s32.totalorder %s18, 8
      // Predicated region
      $region29: #{tpu_custom_call.1} parent=5 // pred_check
        %p276 = pneg %p275
      $region30: #{tpu_custom_call.1} parent=5 // pred_check_branch
        %278 = sbr.rel (%p276) target = $region32
      $region31: #{tpu_custom_call.1} parent=5 // pred_region
        // Predicated region
        $region33: #{tpu_custom_call.1} parent=31 // pred_check
          %p279 = pneg %p71
        $region34: #{tpu_custom_call.1} parent=31 // pred_check_branch
          %281 = sbr.rel (%p279) target = $region36
        $region35: #{tpu_custom_call.1} parent=31 // pred_region
          %p282 = scmp.lt.s32.totalorder %s25, 1
          %s283 = scalar_select %p282, %s25, 1
          %s284 = smul.addr %s283, 5
          %s285 = smul.addr %s284, 8
          %s286 = scalar_lea.vmem %s1, %s285
        $region36: #{tpu_custom_call.1} parent=31 // pred_fallthru
          _
        // Predicated region
        $region37: #{tpu_custom_call.1} parent=31 // pred_check
          %p287 = pneg %p97
        $region38: #{tpu_custom_call.1} parent=31 // pred_check_branch
          %289 = sbr.rel (%p287) target = $region40
        $region39: #{tpu_custom_call.1} parent=31 // pred_region
          %p290 = scmp.lt.s32.totalorder %s25, 1
          %s291 = scalar_select %p290, %s25, 1
          %s292 = smul.addr %s291, 5
          %s293 = smul.addr %s292, 8
          %s294 = scalar_lea.vmem %s2, %s293
        $region40: #{tpu_custom_call.1} parent=31 // pred_fallthru
          _
        // Predicated region
        $region41: #{tpu_custom_call.1} parent=31 // pred_check
          %p295 = pneg %p188
        $region42: #{tpu_custom_call.1} parent=31 // pred_check_branch
          %297 = sbr.rel (%p295) target = $region44
        $region43: #{tpu_custom_call.1} parent=31 // pred_region
          %p298 = scmp.lt.s32.totalorder %s25, 1
          %s299 = scalar_select %p298, %s25, 1
          %p300 = scmp.lt.s32.totalorder %s26, 3
          %s301 = scalar_select %p300, %s26, 3
          %s302 = smul.addr %s299, 4
          %s303 = sadd.s32 %s301, %s302
          %s304 = smul.addr %s303, 8
          %s305 = scalar_lea.vmem %s6, %s304
        $region44: #{tpu_custom_call.1} parent=31 // pred_fallthru
          _
      $region32: #{tpu_custom_call.1} parent=5 // pred_fallthru
        _
      %p306 = scmp.le.s32.totalorder 1, %s18
      %p307 = scmp.lt.s32.totalorder %s18, 9
      %p308 = pnand %p306, %p307
      %p309 = pneg %p308
      // Predicated region
      $region45: #{tpu_custom_call.1} parent=5 // pred_check
        _
      $region46: #{tpu_custom_call.1} parent=5 // pred_check_branch
        %311 = sbr.rel (%p308) target = $region48
      $region47: #{tpu_custom_call.1} parent=5 // pred_region
        %s312 = ssub.s32 %s18, 1
        %p313 = pneg %p51
        %p314 = pneg %p48
        %p315 = scmp.lt.s32.totalorder %s27, 1
        %s316 = scalar_select %p315, %s27, 1
        %s317 = smul.addr %s316, 5
        %s318 = smul.addr %s317, 8
        %s319 = scalar_lea.vmem %s1, %s318
        %p320 = pneg %p77
        %p321 = pneg %p74
        %p322 = scmp.lt.s32.totalorder %s27, 1
        %s323 = scalar_select %p322, %s27, 1
        %s324 = smul.addr %s323, 5
        %s325 = smul.addr %s324, 8
        %s326 = scalar_lea.vmem %s2, %s325
        %p327 = pneg %p103
        %p328 = pneg %p100
        %p329 = pneg %p124
        %p330 = pneg %p121
        %p331 = pneg %p145
        %p332 = pneg %p142
        %p333 = pneg %p166
        %p334 = pneg %p163
        %p335 = scmp.lt.s32.totalorder %s27, 1
        %s336 = scalar_select %p335, %s27, 1
        %p337 = scmp.lt.s32.totalorder %s28, 3
        %s338 = scalar_select %p337, %s28, 3
        %s339 = smul.addr %s336, 4
        %s340 = sadd.s32 %s338, %s339
        %s341 = smul.addr %s340, 8
        %s342 = scalar_lea.vmem %s6, %s341
        %p343 = pneg %p194
        %p344 = pneg %p191
        %p345 = pneg %p222
        %p346 = pneg %p219
        %s347 = smul.u32 4, %s28
        %p348 = scmp.lt.s32.totalorder %s27, 1
        %s349 = scalar_select %p348, %s27, 1
        %p350 = scmp.lt.s32.totalorder %s347, 15
        %s351 = scalar_select %p350, %s347, 15
        %s352 = smul.addr %s349, 16
        %s353 = sadd.s32 %s351, %s352
        %s354 = smul.addr %s353, 8
        %s355 = scalar_lea.vmem %s7, %s354
        %p356 = pneg %p248
        %p357 = pneg %p245
        %s358 = sand.u32 %s235, 1
        %s359 = scalar_lea.sflag [#allocation5], %s358
        %s360 = sand.u32 %s235, 1
        %s361 = scalar_lea.vmem [#allocation4], %s360
        %p362 = scmp.lt.s32.totalorder %s27, 1
        %s363 = scalar_select %p362, %s27, 1
        %s364 = smul.addr %s363, 5
        %s365 = smul.addr %s364, 8
        %s366 = scalar_lea.vmem %s1, %s365
        %p367 = scmp.lt.s32.totalorder %s27, 1
        %s368 = scalar_select %p367, %s27, 1
        %s369 = smul.addr %s368, 5
        %s370 = smul.addr %s369, 8
        %s371 = scalar_lea.vmem %s2, %s370
        %p372 = scmp.lt.s32.totalorder %s27, 1
        %s373 = scalar_select %p372, %s27, 1
        %p374 = scmp.lt.s32.totalorder %s28, 3
        %s375 = scalar_select %p374, %s28, 3
        %s376 = smul.addr %s373, 4
        %s377 = sadd.s32 %s375, %s376
        %s378 = smul.addr %s377, 8
        %s379 = scalar_lea.vmem %s6, %s378
        %s380 = smul.u32 4, %s28
        %p381 = scmp.lt.s32.totalorder %s27, 1
        %s382 = scalar_select %p381, %s27, 1
        %p383 = scmp.lt.s32.totalorder %s380, 15
        %s384 = scalar_select %p383, %s380, 15
        %s385 = smul.addr %s382, 16
        %s386 = sadd.s32 %s384, %s385
        %s387 = smul.addr %s386, 8
        %s388 = scalar_lea.vmem %s7, %s387
        %s389 = smul.u32 4, %s28
        %p390 = scmp.eq.s32.totalorder %s28, 0
        // Predicated region
        $region49: #{tpu_custom_call.1} parent=47 // pred_check
          %p391 = pneg %p390
        $region50: #{tpu_custom_call.1} parent=47 // pred_check_branch
          %393 = sbr.rel (%p391) target = $region52
        $region51: #{tpu_custom_call.1} parent=47 // pred_region
          %v394 = vld [vmem:[%s0] sm:$0xff]
          %v395 = vld [vmem:[%s0 + $0x8] sm:$0xff]
          %v396 = vld [vmem:[%s0 + $0x10] sm:$0xff]
          %v397 = vld [vmem:[%s0 + $0x18] sm:$0xff]
          %v398 = vld [vmem:[%s0 + $0x20] sm:$0xff]
          %v399 = vld [vmem:[%s0 + $0x28] sm:$0xff]
          %v400 = vld [vmem:[%s0 + $0x30] sm:$0xff]
          %v401 = vld [vmem:[%s0 + $0x38] sm:$0xff]
          %v402 = vld [vmem:[%s0 + $0x40] sm:$0xff]
          %v403 = vld [vmem:[%s0 + $0x48] sm:$0xff]
          %v404 = vld [vmem:[%s0 + $0x50] sm:$0xff]
          %v405 = vld [vmem:[%s0 + $0x58] sm:$0xff]
          %v406 = vld [vmem:[%s0 + $0x60] sm:$0xff]
          %v407 = vld [vmem:[%s0 + $0x68] sm:$0xff]
          %v408 = vld [vmem:[%s0 + $0x70] sm:$0xff]
          %v409 = vld [vmem:[%s0 + $0x78] sm:$0xff]
          %v410 = vld [vmem:[%s366] sm:$0xff]
          %v411 = vld [vmem:[%s366 + $0x8] sm:$0xff]
          %v412 = vld [vmem:[%s366 + $0x10] sm:$0xff]
          %v413 = vld [vmem:[%s366 + $0x18] sm:$0xff]
          %v414 = vld [vmem:[%s366 + $0x20] sm:$0x1]
          %vm415 = vcmask 269312
          %v417 = vsel %vm415, %v394, 0
          %v420 = vsel %vm415, %v395, 0
          %v423 = vsel %vm415, %v396, 0
          %v426 = vsel %vm415, %v397, 0
          %v429 = vsel %vm415, %v398, 0
          %v432 = vsel %vm415, %v399, 0
          %v435 = vsel %vm415, %v400, 0
          %v438 = vsel %vm415, %v401, 0
          %v441 = vsel %vm415, %v402, 0
          %v444 = vsel %vm415, %v403, 0
          %v447 = vsel %vm415, %v404, 0
          %v450 = vsel %vm415, %v405, 0
          %v453 = vsel %vm415, %v406, 0
          %v456 = vsel %vm415, %v407, 0
          %v459 = vsel %vm415, %v408, 0
          %v462 = vsel %vm415, %v409, 0
          %vm464 = vcmask 1040384
          %v466 = vsel %vm464, %v414, 0
          %468 = vmatprep.subr.mxu0 0.0
          %469 = vmatpush1.msra.mxu0 %v410
          %470 = vmatprep.subr.mxu0 0.0
          %471 = vmatpush1.msra.mxu0 %v411
          %472 = vmatprep.subr.mxu0 0.0
          %473 = vmatpush1.msra.mxu0 %v412
          %474 = vmatprep.subr.mxu0 0.0
          %475 = vmatpush1.msra.mxu0 %v413
          %476 = vmatprep.subr.mxu0 0.0
          %477 = vmatpush1.msra.mxu0 %v466
          %478 = vmatprep.subr.mxu0 0.0
          %479 = vmatpush1.msra.mxu0 0.0
          %480 = vmatprep.subr.mxu0 0.0
          %481 = vmatpush1.msra.mxu0 0.0
          %482 = vmatprep.subr.mxu0 0.0
          %483 = vmatpush1.msra.mxu0 0.0
          %484 = vmatprep.subr.mxu0 0.0
          %485 = vmatpush1.msra.mxu0 0.0
          %486 = vmatprep.subr.mxu0 0.0
          %487 = vmatpush1.msra.mxu0 0.0
          %488 = vmatprep.subr.mxu0 0.0
          %489 = vmatpush1.msra.mxu0 0.0
          %490 = vmatprep.subr.mxu0 0.0
          %491 = vmatpush1.msra.mxu0 0.0
          %492 = vmatprep.subr.mxu0 0.0
          %493 = vmatpush1.msra.mxu0 0.0
          %494 = vmatprep.subr.mxu0 0.0
          %495 = vmatpush1.msra.mxu0 0.0
          %496 = vmatprep.subr.mxu0 0.0
          %497 = vmatpush1.msra.mxu0 0.0
          %498 = vmatprep.subr.mxu0 0.0
          %499 = vmatpush1.msra.mxu0 0.0
          %500 = vmatprep.subr.mxu0 0.0
          %501 = vmatpush1.msra.mxu0 0.0
          %502 = vmatprep.subr.mxu0 0.0
          %503 = vmatpush1.msra.mxu0 0.0
          %504 = vmatprep.subr.mxu0 0.0
          %505 = vmatpush1.msra.mxu0 0.0
          %506 = vmatprep.subr.mxu0 0.0
          %507 = vmatpush1.msra.mxu0 0.0
          %508 = vmatprep.subr.mxu0 0.0
          %509 = vmatpush1.msra.mxu0 0.0
          %510 = vmatprep.subr.mxu0 0.0
          %511 = vmatpush1.msra.mxu0 0.0
          %512 = vmatprep.subr.mxu0 0.0
          %513 = vmatpush1.msra.mxu0 0.0
          %514 = vmatprep.subr.mxu0 0.0
          %515 = vmatpush1.msra.mxu0 0.0
          %516 = vmatprep.subr.mxu0 0.0
          %517 = vmatpush1.msra.mxu0 0.0
          %518 = vmatprep.subr.mxu0 0.0
          %519 = vmatpush1.msra.mxu0 0.0
          %520 = vmatprep.subr.mxu0 0.0
          %521 = vmatpush1.msra.mxu0 0.0
          %522 = vmatprep.subr.mxu0 0.0
          %523 = vmatpush1.msra.mxu0 0.0
          %524 = vmatprep.subr.mxu0 0.0
          %525 = vmatpush1.msra.mxu0 0.0
          %526 = vmatprep.subr.mxu0 0.0
          %527 = vmatpush1.msra.mxu0 0.0
          %528 = vmatprep.subr.mxu0 0.0
          %529 = vmatpush1.msra.mxu0 0.0
          %530 = vmatprep.subr.mxu0 0.0
          %531 = vmatpush1.msra.mxu0 0.0
          %532 = vmatprep.mubr.f32.mxu0 0.0
          %533 = vmatmul.mubr.f32.gmra.mrb[0].mxu0 %v417
          %v534 = vpop.f32.mrb[0].mxu0
          %v535 = vadd.f32 0.0, %v534
          %v536 = vpop.f32.mrb[0].mxu0
          %537 = vmatprep.mubr.f32.mxu0 0.0
          %538 = vmatmul.mubr.f32.gmra.mrb[0].mxu0 %v420
          %v539 = vpop.f32.mrb[0].mxu0
          %v540 = vadd.f32 0.0, %v539
          %v541 = vpop.f32.mrb[0].mxu0
          %542 = vmatprep.mubr.f32.mxu0 0.0
          %543 = vmatmul.mubr.f32.gmra.mrb[0].mxu0 %v423
          %v544 = vpop.f32.mrb[0].mxu0
          %v545 = vadd.f32 0.0, %v544
          %v546 = vpop.f32.mrb[0].mxu0
          %547 = vmatprep.mubr.f32.mxu0 0.0
          %548 = vmatmul.mubr.f32.gmra.mrb[0].mxu0 %v426
          %v549 = vpop.f32.mrb[0].mxu0
          %v550 = vadd.f32 0.0, %v549
          %v551 = vpop.f32.mrb[0].mxu0
          %552 = vmatprep.mubr.f32.mxu0 0.0
          %553 = vmatmul.mubr.f32.gmra.mrb[0].mxu0 %v429
          %v554 = vpop.f32.mrb[0].mxu0
          %v555 = vadd.f32 0.0, %v554
          %v556 = vpop.f32.mrb[0].mxu0
          %557 = vmatprep.mubr.f32.mxu0 0.0
          %558 = vmatmul.mubr.f32.gmra.mrb[0].mxu0 %v432
          %v559 = vpop.f32.mrb[0].mxu0
          %v560 = vadd.f32 0.0, %v559
          %v561 = vpop.f32.mrb[0].mxu0
          %562 = vmatprep.mubr.f32.mxu0 0.0
          %563 = vmatmul.mubr.f32.gmra.mrb[0].mxu0 %v435
          %v564 = vpop.f32.mrb[0].mxu0
          %v565 = vadd.f32 0.0, %v564
          %v566 = vpop.f32.mrb[0].mxu0
          %567 = vmatprep.mubr.f32.mxu0 0.0
          %568 = vmatmul.mubr.f32.gmra.mrb[0].mxu0 %v438
          %v569 = vpop.f32.mrb[0].mxu0
          %v570 = vadd.f32 0.0, %v569
          %v571 = vpop.f32.mrb[0].mxu0
          %572 = vmatprep.mubr.f32.mxu0 0.0
          %573 = vmatmul.mubr.f32.gmra.mrb[0].mxu0 %v441
          %v574 = vpop.f32.mrb[0].mxu0
          %v575 = vadd.f32 0.0, %v574
          %v576 = vpop.f32.mrb[0].mxu0
          %577 = vmatprep.mubr.f32.mxu0 0.0
          %578 = vmatmul.mubr.f32.gmra.mrb[0].mxu0 %v444
          %v579 = vpop.f32.mrb[0].mxu0
          %v580 = vadd.f32 0.0, %v579
          %v581 = vpop.f32.mrb[0].mxu0
          %582 = vmatprep.mubr.f32.mxu0 0.0
          %583 = vmatmul.mubr.f32.gmra.mrb[0].mxu0 %v447
          %v584 = vpop.f32.mrb[0].mxu0
          %v585 = vadd.f32 0.0, %v584
          %v586 = vpop.f32.mrb[0].mxu0
          %587 = vmatprep.mubr.f32.mxu0 0.0
          %588 = vmatmul.mubr.f32.gmra.mrb[0].mxu0 %v450
          %v589 = vpop.f32.mrb[0].mxu0
          %v590 = vadd.f32 0.0, %v589
          %v591 = vpop.f32.mrb[0].mxu0
          %592 = vmatprep.mubr.f32.mxu0 0.0
          %593 = vmatmul.mubr.f32.gmra.mrb[0].mxu0 %v453
          %v594 = vpop.f32.mrb[0].mxu0
          %v595 = vadd.f32 0.0, %v594
          %v596 = vpop.f32.mrb[0].mxu0
          %597 = vmatprep.mubr.f32.mxu0 0.0
          %598 = vmatmul.mubr.f32.gmra.mrb[0].mxu0 %v456
          %v599 = vpop.f32.mrb[0].mxu0
          %v600 = vadd.f32 0.0, %v599
          %v601 = vpop.f32.mrb[0].mxu0
          %602 = vmatprep.mubr.f32.mxu0 0.0
          %603 = vmatmul.mubr.f32.gmra.mrb[0].mxu0 %v459
          %v604 = vpop.f32.mrb[0].mxu0
          %v605 = vadd.f32 0.0, %v604
          %v606 = vpop.f32.mrb[0].mxu0
          %607 = vmatprep.mubr.f32.mxu0 0.0
          %608 = vmatmul.mubr.f32.gmra.mrb[0].mxu0 %v462
          %v609 = vpop.f32.mrb[0].mxu0
          %v610 = vadd.f32 0.0, %v609
          %v611 = vpop.f32.mrb[0].mxu0
          %612 = vdwg.mxu0
          %vm613 = vcmask 556032
          %614 = vst.msk [vmem:[#allocation2] sm:$0xff] %vm613, %v535
          %615 = vst.msk [vmem:[#allocation2 + $0x8] sm:$0xff] %vm613, %v540
          %616 = vst.msk [vmem:[#allocation2 + $0x10] sm:$0xff] %vm613, %v545
          %617 = vst.msk [vmem:[#allocation2 + $0x18] sm:$0xff] %vm613, %v550
          %618 = vst.msk [vmem:[#allocation2 + $0x20] sm:$0xff] %vm613, %v555
          %619 = vst.msk [vmem:[#allocation2 + $0x28] sm:$0xff] %vm613, %v560
          %620 = vst.msk [vmem:[#allocation2 + $0x30] sm:$0xff] %vm613, %v565
          %621 = vst.msk [vmem:[#allocation2 + $0x38] sm:$0xff] %vm613, %v570
          %622 = vst.msk [vmem:[#allocation2 + $0x40] sm:$0xff] %vm613, %v575
          %623 = vst.msk [vmem:[#allocation2 + $0x48] sm:$0xff] %vm613, %v580
          %624 = vst.msk [vmem:[#allocation2 + $0x50] sm:$0xff] %vm613, %v585
          %625 = vst.msk [vmem:[#allocation2 + $0x58] sm:$0xff] %vm613, %v590
          %626 = vst.msk [vmem:[#allocation2 + $0x60] sm:$0xff] %vm613, %v595
          %627 = vst.msk [vmem:[#allocation2 + $0x68] sm:$0xff] %vm613, %v600
          %628 = vst.msk [vmem:[#allocation2 + $0x70] sm:$0xff] %vm613, %v605
          %629 = vst.msk [vmem:[#allocation2 + $0x78] sm:$0xff] %vm613, %v610
          %646 = vrot.lane.b32.xlu0 %v535, 60
          %v647 = vpop.permute.xlu0 %646
          %648 = vrot.lane.b32.xlu0 %v540, 60
          %v649 = vpop.permute.xlu0 %648
          %650 = vrot.lane.b32.xlu0 %v545, 60
          %v651 = vpop.permute.xlu0 %650
          %652 = vrot.lane.b32.xlu0 %v550, 60
          %v653 = vpop.permute.xlu0 %652
          %654 = vrot.lane.b32.xlu0 %v555, 60
          %v655 = vpop.permute.xlu0 %654
          %656 = vrot.lane.b32.xlu0 %v560, 60
          %v657 = vpop.permute.xlu0 %656
          %658 = vrot.lane.b32.xlu0 %v565, 60
          %v659 = vpop.permute.xlu0 %658
          %660 = vrot.lane.b32.xlu0 %v570, 60
          %v661 = vpop.permute.xlu0 %660
          %662 = vrot.lane.b32.xlu0 %v575, 60
          %v663 = vpop.permute.xlu0 %662
          %664 = vrot.lane.b32.xlu0 %v580, 60
          %v665 = vpop.permute.xlu0 %664
          %666 = vrot.lane.b32.xlu0 %v585, 60
          %v667 = vpop.permute.xlu0 %666
          %668 = vrot.lane.b32.xlu0 %v590, 60
          %v669 = vpop.permute.xlu0 %668
          %670 = vrot.lane.b32.xlu0 %v595, 60
          %v671 = vpop.permute.xlu0 %670
          %672 = vrot.lane.b32.xlu0 %v600, 60
          %v673 = vpop.permute.xlu0 %672
          %674 = vrot.lane.b32.xlu0 %v605, 60
          %v675 = vpop.permute.xlu0 %674
          %676 = vrot.lane.b32.xlu0 %v610, 60
          %v677 = vpop.permute.xlu0 %676
          %694 = vxpose.xlu0.b32.start [1/16] %v647, 128
          %695 = vxpose.xlu0.b32.cont [2/16] %v649, 128
          %696 = vxpose.xlu0.b32.cont [3/16] %v651, 128
          %697 = vxpose.xlu0.b32.cont [4/16] %v653, 128
          %698 = vxpose.xlu0.b32.cont [5/16] %v655, 128
          %699 = vxpose.xlu0.b32.cont [6/16] %v657, 128
          %700 = vxpose.xlu0.b32.cont [7/16] %v659, 128
          %701 = vxpose.xlu0.b32.cont [8/16] %v661, 128
          %702 = vxpose.xlu0.b32.cont [9/16] %v663, 128
          %703 = vxpose.xlu0.b32.cont [10/16] %v665, 128
          %704 = vxpose.xlu0.b32.cont [11/16] %v667, 128
          %705 = vxpose.xlu0.b32.cont [12/16] %v669, 128
          %706 = vxpose.xlu0.b32.cont [13/16] %v671, 128
          %707 = vxpose.xlu0.b32.cont [14/16] %v673, 128
          %708 = vxpose.xlu0.b32.cont [15/16] %v675, 128
          %709 = vxpose.xlu0.b32.end [16/16] %v677, 128
          %v710 = vpop.trf.xlu0
          %v711 = vpop.trf.xlu0
          %v712 = vpop.trf.xlu0
          %v713 = vpop.trf.xlu0
          %v714 = vpop.trf.xlu0
          %v715 = vpop.trf.xlu0
          %v716 = vpop.trf.xlu0
          %v717 = vpop.trf.xlu0
          %v718 = vpop.trf.xlu0
          %v719 = vpop.trf.xlu0
          %v720 = vpop.trf.xlu0
          %v721 = vpop.trf.xlu0
          %v722 = vpop.trf.xlu0
          %v723 = vpop.trf.xlu0
          %v724 = vpop.trf.xlu0
          %v725 = vpop.trf.xlu0
          %726 = vst [vmem:[#allocation3] sm:$0xf] %v710
          %727 = vst [vmem:[%s361] sm:$0x1] 0.0
        $region52: #{tpu_custom_call.1} parent=47 // pred_fallthru
          _
        %v728 = vld [vmem:[%s379] sm:$0xff]
        %v729 = vunpack.c.0.s8 %v728
        %v730 = vunpack.c.1.s8 %v728
        %v731 = vunpack.c.2.s8 %v728
        %v732 = vunpack.c.3.s8 %v728
        %vm733 = vcmp.ne.s32.totalorder %v729, 0
        %vm734 = vcmp.ne.s32.totalorder %v730, 0
        %vm735 = vcmp.ne.s32.totalorder %v731, 0
        %vm736 = vcmp.ne.s32.totalorder %v732, 0
        %s737 = smul.u32 %s28, 32
        %s738 = scalar_lea.vmem %s0, %s737
        %v739 = vld [vmem:[%s738] sm:$0xff]
        %v740 = vld [vmem:[%s738 + $0x8] sm:$0xff]
        %v741 = vld [vmem:[%s738 + $0x10] sm:$0xff]
        %v742 = vld [vmem:[%s738 + $0x18] sm:$0xff]
        %v743 = vld [vmem:[%s371] sm:$0xff]
        %v744 = vld [vmem:[%s371 + $0x8] sm:$0xff]
        %v745 = vld [vmem:[%s371 + $0x10] sm:$0xff]
        %v746 = vld [vmem:[%s371 + $0x18] sm:$0xff]
        %v747 = vld [vmem:[%s371 + $0x20] sm:$0x1]
        %vm748 = vcmask 269312
        %v750 = vsel %vm748, %v739, 0
        %v753 = vsel %vm748, %v740, 0
        %v756 = vsel %vm748, %v741, 0
        %v759 = vsel %vm748, %v742, 0
        %vm761 = vcmask 1040384
        %v763 = vsel %vm761, %v747, 0
        %765 = vmatprep.subr.mxu0 0.0
        %766 = vmatpush1.msra.mxu0 %v743
        %767 = vmatprep.subr.mxu0 0.0
        %768 = vmatpush1.msra.mxu0 %v744
        %769 = vmatprep.subr.mxu0 0.0
        %770 = vmatpush1.msra.mxu0 %v745
        %771 = vmatprep.subr.mxu0 0.0
        %772 = vmatpush1.msra.mxu0 %v746
        %773 = vmatprep.subr.mxu0 0.0
        %774 = vmatpush1.msra.mxu0 %v763
        %775 = vmatprep.subr.mxu0 0.0
        %776 = vmatpush1.msra.mxu0 0.0
        %777 = vmatprep.subr.mxu0 0.0
        %778 = vmatpush1.msra.mxu0 0.0
        %779 = vmatprep.subr.mxu0 0.0
        %780 = vmatpush1.msra.mxu0 0.0
        %781 = vmatprep.subr.mxu0 0.0
        %782 = vmatpush1.msra.mxu0 0.0
        %783 = vmatprep.subr.mxu0 0.0
        %784 = vmatpush1.msra.mxu0 0.0
        %785 = vmatprep.subr.mxu0 0.0
        %786 = vmatpush1.msra.mxu0 0.0
        %787 = vmatprep.subr.mxu0 0.0
        %788 = vmatpush1.msra.mxu0 0.0
        %789 = vmatprep.subr.mxu0 0.0
        %790 = vmatpush1.msra.mxu0 0.0
        %791 = vmatprep.subr.mxu0 0.0
        %792 = vmatpush1.msra.mxu0 0.0
        %793 = vmatprep.subr.mxu0 0.0
        %794 = vmatpush1.msra.mxu0 0.0
        %795 = vmatprep.subr.mxu0 0.0
        %796 = vmatpush1.msra.mxu0 0.0
        %797 = vmatprep.subr.mxu0 0.0
        %798 = vmatpush1.msra.mxu0 0.0
        %799 = vmatprep.subr.mxu0 0.0
        %800 = vmatpush1.msra.mxu0 0.0
        %801 = vmatprep.subr.mxu0 0.0
        %802 = vmatpush1.msra.mxu0 0.0
        %803 = vmatprep.subr.mxu0 0.0
        %804 = vmatpush1.msra.mxu0 0.0
        %805 = vmatprep.subr.mxu0 0.0
        %806 = vmatpush1.msra.mxu0 0.0
        %807 = vmatprep.subr.mxu0 0.0
        %808 = vmatpush1.msra.mxu0 0.0
        %809 = vmatprep.subr.mxu0 0.0
        %810 = vmatpush1.msra.mxu0 0.0
        %811 = vmatprep.subr.mxu0 0.0
        %812 = vmatpush1.msra.mxu0 0.0
        %813 = vmatprep.subr.mxu0 0.0
        %814 = vmatpush1.msra.mxu0 0.0
        %815 = vmatprep.subr.mxu0 0.0
        %816 = vmatpush1.msra.mxu0 0.0
        %817 = vmatprep.subr.mxu0 0.0
        %818 = vmatpush1.msra.mxu0 0.0
        %819 = vmatprep.subr.mxu0 0.0
        %820 = vmatpush1.msra.mxu0 0.0
        %821 = vmatprep.subr.mxu0 0.0
        %822 = vmatpush1.msra.mxu0 0.0
        %823 = vmatprep.subr.mxu0 0.0
        %824 = vmatpush1.msra.mxu0 0.0
        %825 = vmatprep.subr.mxu0 0.0
        %826 = vmatpush1.msra.mxu0 0.0
        %827 = vmatprep.subr.mxu0 0.0
        %828 = vmatpush1.msra.mxu0 0.0
        %829 = vmatprep.mubr.f32.mxu0 0.0
        %830 = vmatmul.mubr.f32.gmra.mrb[0].mxu0 %v750
        %v831 = vpop.f32.mrb[0].mxu0
        %v832 = vadd.f32 0.0, %v831
        %v833 = vpop.f32.mrb[0].mxu0
        %834 = vmatprep.mubr.f32.mxu0 0.0
        %835 = vmatmul.mubr.f32.gmra.mrb[0].mxu0 %v753
        %v836 = vpop.f32.mrb[0].mxu0
        %v837 = vadd.f32 0.0, %v836
        %v838 = vpop.f32.mrb[0].mxu0
        %839 = vmatprep.mubr.f32.mxu0 0.0
        %840 = vmatmul.mubr.f32.gmra.mrb[0].mxu0 %v756
        %v841 = vpop.f32.mrb[0].mxu0
        %v842 = vadd.f32 0.0, %v841
        %v843 = vpop.f32.mrb[0].mxu0
        %844 = vmatprep.mubr.f32.mxu0 0.0
        %845 = vmatmul.mubr.f32.gmra.mrb[0].mxu0 %v759
        %v846 = vpop.f32.mrb[0].mxu0
        %v847 = vadd.f32 0.0, %v846
        %v848 = vpop.f32.mrb[0].mxu0
        %849 = vdwg.mxu0
        %v850 = vld [vmem:[#allocation3] sm:$0x1]
        %852 = vset.pattern.permute.xlu0 0
        %853 = vperm.xlu0 %852, %v832
        %v854 = vpop.permute.xlu0 %853
        %857 = vset.pattern.permute.xlu0 0
        %858 = vperm.xlu0 %857, %v837
        %v859 = vpop.permute.xlu0 %858
        %862 = vset.pattern.permute.xlu0 0
        %863 = vperm.xlu0 %862, %v842
        %v864 = vpop.permute.xlu0 %863
        %867 = vset.pattern.permute.xlu0 0
        %868 = vperm.xlu0 %867, %v847
        %v869 = vpop.permute.xlu0 %868
        %v871 = vlaneseq
        %v872 = vshrl.u32 %v871, 7
        %v873 = vsub.s32 0, %v872
        %v874 = vrot.slane %v850, %v873
        %v875 = vadd.f32 %v854, %v874
        %v876 = vadd.f32 %v859, %v874
        %v877 = vadd.f32 %v864, %v874
        %v878 = vadd.f32 %v869, %v874
        %v879 = vmul.f32 %v875, 0.2
        %v880 = vmul.f32 %v876, 0.2
        %v881 = vmul.f32 %v877, 0.2
        %v882 = vmul.f32 %v878, 0.2
        %v883 = vmax.f32 %v875, %v879
        %v884 = vmax.f32 %v876, %v880
        %v885 = vmax.f32 %v877, %v881
        %v886 = vmax.f32 %v878, %v882
        %v887 = vsel %vm733, %v883, -9e+15
        %v888 = vsel %vm734, %v884, -9e+15
        %v889 = vsel %vm735, %v885, -9e+15
        %v890 = vsel %vm736, %v886, -9e+15
        %891 = vmax.xlane.f32.xlu0 %v887
        %v892 = vpop.xlane.xlu0 %891
        %893 = vmax.xlane.f32.xlu0 %v888
        %v894 = vpop.xlane.xlu0 %893
        %895 = vmax.xlane.f32.xlu0 %v889
        %v896 = vpop.xlane.xlu0 %895
        %897 = vmax.xlane.f32.xlu0 %v890
        %v898 = vpop.xlane.xlu0 %897
        %v899 = vsub.f32 %v887, %v892
        %v900 = vsub.f32 %v888, %v894
        %v901 = vsub.f32 %v889, %v896
        %v902 = vsub.f32 %v890, %v898
        %v903 = vmul.f32 %v899, 1.442695
        %v904 = vpow.pop %v903
        %v905 = vmul.f32 %v900, 1.442695
        %v906 = vpow.pop %v905
        %v907 = vmul.f32 %v901, 1.442695
        %v908 = vpow.pop %v907
        %v909 = vmul.f32 %v902, 1.442695
        %v910 = vpow.pop %v909
        %v911 = vld [vmem:[#allocation2] sm:$0xff]
        %v912 = vld [vmem:[#allocation2 + $0x8] sm:$0xff]
        %v913 = vld [vmem:[#allocation2 + $0x10] sm:$0xff]
        %v914 = vld [vmem:[#allocation2 + $0x18] sm:$0xff]
        %v915 = vld [vmem:[#allocation2 + $0x20] sm:$0xff]
        %v916 = vld [vmem:[#allocation2 + $0x28] sm:$0xff]
        %v917 = vld [vmem:[#allocation2 + $0x30] sm:$0xff]
        %v918 = vld [vmem:[#allocation2 + $0x38] sm:$0xff]
        %v919 = vld [vmem:[#allocation2 + $0x40] sm:$0xff]
        %v920 = vld [vmem:[#allocation2 + $0x48] sm:$0xff]
        %v921 = vld [vmem:[#allocation2 + $0x50] sm:$0xff]
        %v922 = vld [vmem:[#allocation2 + $0x58] sm:$0xff]
        %v923 = vld [vmem:[#allocation2 + $0x60] sm:$0xff]
        %v924 = vld [vmem:[#allocation2 + $0x68] sm:$0xff]
        %v925 = vld [vmem:[#allocation2 + $0x70] sm:$0xff]
        %v926 = vld [vmem:[#allocation2 + $0x78] sm:$0xff]
        %927 = vmatprep.subr.mxu0 0.0
        %928 = vmatpush1.msra.mxu0 %v911
        %929 = vmatprep.subr.mxu0 0.0
        %930 = vmatpush1.msra.mxu0 %v912
        %931 = vmatprep.subr.mxu0 0.0
        %932 = vmatpush1.msra.mxu0 %v913
        %933 = vmatprep.subr.mxu0 0.0
        %934 = vmatpush1.msra.mxu0 %v914
        %935 = vmatprep.subr.mxu0 0.0
        %936 = vmatpush1.msra.mxu0 %v915
        %937 = vmatprep.subr.mxu0 0.0
        %938 = vmatpush1.msra.mxu0 %v916
        %939 = vmatprep.subr.mxu0 0.0
        %940 = vmatpush1.msra.mxu0 %v917
        %941 = vmatprep.subr.mxu0 0.0
        %942 = vmatpush1.msra.mxu0 %v918
        %943 = vmatprep.subr.mxu0 0.0
        %944 = vmatpush1.msra.mxu0 %v919
        %945 = vmatprep.subr.mxu0 0.0
        %946 = vmatpush1.msra.mxu0 %v920
        %947 = vmatprep.subr.mxu0 0.0
        %948 = vmatpush1.msra.mxu0 %v921
        %949 = vmatprep.subr.mxu0 0.0
        %950 = vmatpush1.msra.mxu0 %v922
        %951 = vmatprep.subr.mxu0 0.0
        %952 = vmatpush1.msra.mxu0 %v923
        %953 = vmatprep.subr.mxu0 0.0
        %954 = vmatpush1.msra.mxu0 %v924
        %955 = vmatprep.subr.mxu0 0.0
        %956 = vmatpush1.msra.mxu0 %v925
        %957 = vmatprep.subr.mxu0 0.0
        %958 = vmatpush1.msra.mxu0 %v926
        %959 = vmatprep.subr.mxu0 0.0
        %960 = vmatpush1.msra.mxu0 0.0
        %961 = vmatprep.subr.mxu0 0.0
        %962 = vmatpush1.msra.mxu0 0.0
        %963 = vmatprep.subr.mxu0 0.0
        %964 = vmatpush1.msra.mxu0 0.0
        %965 = vmatprep.subr.mxu0 0.0
        %966 = vmatpush1.msra.mxu0 0.0
        %967 = vmatprep.subr.mxu0 0.0
        %968 = vmatpush1.msra.mxu0 0.0
        %969 = vmatprep.subr.mxu0 0.0
        %970 = vmatpush1.msra.mxu0 0.0
        %971 = vmatprep.subr.mxu0 0.0
        %972 = vmatpush1.msra.mxu0 0.0
        %973 = vmatprep.subr.mxu0 0.0
        %974 = vmatpush1.msra.mxu0 0.0
        %975 = vmatprep.subr.mxu0 0.0
        %976 = vmatpush1.msra.mxu0 0.0
        %977 = vmatprep.subr.mxu0 0.0
        %978 = vmatpush1.msra.mxu0 0.0
        %979 = vmatprep.subr.mxu0 0.0
        %980 = vmatpush1.msra.mxu0 0.0
        %981 = vmatprep.subr.mxu0 0.0
        %982 = vmatpush1.msra.mxu0 0.0
        %983 = vmatprep.subr.mxu0 0.0
        %984 = vmatpush1.msra.mxu0 0.0
        %985 = vmatprep.subr.mxu0 0.0
        %986 = vmatpush1.msra.mxu0 0.0
        %987 = vmatprep.subr.mxu0 0.0
        %988 = vmatpush1.msra.mxu0 0.0
        %989 = vmatprep.subr.mxu0 0.0
        %990 = vmatpush1.msra.mxu0 0.0
        %991 = vmatprep.mubr.f32.mxu0 0.0
        %992 = vmatmul.mubr.f32.gmra.mrb[0].mxu0 %v904
        %v993 = vpop.f32.mrb[0].mxu0
        %v994 = vadd.f32 0.0, %v993
        %v995 = vpop.f32.mrb[0].mxu0
        %996 = vmatprep.mubr.f32.mxu0 0.0
        %997 = vmatmul.mubr.f32.gmra.mrb[0].mxu0 %v906
        %v998 = vpop.f32.mrb[0].mxu0
        %v999 = vadd.f32 0.0, %v998
        %v1000 = vpop.f32.mrb[0].mxu0
        %1001 = vmatprep.mubr.f32.mxu0 0.0
        %1002 = vmatmul.mubr.f32.gmra.mrb[0].mxu0 %v908
        %v1003 = vpop.f32.mrb[0].mxu0
        %v1004 = vadd.f32 0.0, %v1003
        %v1005 = vpop.f32.mrb[0].mxu0
        %1006 = vmatprep.mubr.f32.mxu0 0.0
        %1007 = vmatmul.mubr.f32.gmra.mrb[0].mxu0 %v910
        %v1008 = vpop.f32.mrb[0].mxu0
        %v1009 = vadd.f32 0.0, %v1008
        %v1010 = vpop.f32.mrb[0].mxu0
        %1011 = vdwg.mxu0
        %v1012 = vrcp.pop %v994
        %v1013 = vmul.f32 1.0, %v1012
        %v1014 = vrcp.pop %v999
        %v1015 = vmul.f32 1.0, %v1014
        %v1016 = vrcp.pop %v1004
        %v1017 = vmul.f32 1.0, %v1016
        %v1018 = vrcp.pop %v1009
        %v1019 = vmul.f32 1.0, %v1018
        %1021 = vset.pattern.permute.xlu0 16
        %1022 = vperm.xlu0 %1021, %v1013
        %v1023 = vpop.permute.xlu0 %1022
        %1026 = vset.pattern.permute.xlu0 16
        %1027 = vperm.xlu0 %1026, %v1015
        %v1028 = vpop.permute.xlu0 %1027
        %1031 = vset.pattern.permute.xlu0 16
        %1032 = vperm.xlu0 %1031, %v1017
        %v1033 = vpop.permute.xlu0 %1032
        %1036 = vset.pattern.permute.xlu0 16
        %1037 = vperm.xlu0 %1036, %v1019
        %v1038 = vpop.permute.xlu0 %1037
        %v1040 = vmul.f32 %v994, %v1023
        %v1041 = vmul.f32 %v999, %v1028
        %v1042 = vmul.f32 %v1004, %v1033
        %v1043 = vmul.f32 %v1009, %v1038
        %vm1044 = vcmp.gt.f32.partialorder %v1040, 0.0
        %vm1045 = vcmp.gt.f32.partialorder %v1041, 0.0
        %vm1046 = vcmp.gt.f32.partialorder %v1042, 0.0
        %vm1047 = vcmp.gt.f32.partialorder %v1043, 0.0
        %v1048 = vmin.f32 %v1040, 0.0
        %v1049 = vmin.f32 %v1041, 0.0
        %v1050 = vmin.f32 %v1042, 0.0
        %v1051 = vmin.f32 %v1043, 0.0
        %v1052 = vmul.f32 %v1048, 1.442695
        %v1053 = vpow.pop %v1052
        %v1054 = vmul.f32 %v1049, 1.442695
        %v1055 = vpow.pop %v1054
        %v1056 = vmul.f32 %v1050, 1.442695
        %v1057 = vpow.pop %v1056
        %v1058 = vmul.f32 %v1051, 1.442695
        %v1059 = vpow.pop %v1058
        %v1060 = vsub.f32 %v1053, 1.0
        %v1061 = vsub.f32 %v1055, 1.0
        %v1062 = vsub.f32 %v1057, 1.0
        %v1063 = vsub.f32 %v1059, 1.0
        %v1064 = vsel %vm1044, %v1040, %v1060
        %v1065 = vsel %vm1045, %v1041, %v1061
        %v1066 = vsel %vm1046, %v1042, %v1062
        %v1067 = vsel %vm1047, %v1043, %v1063
        %v1068 = vld [vmem:[#allocation3 + $0x1] sm:$0x1]
        %1069 = vset.pattern.permute.xlu0 1
        %1070 = vperm.xlu0 %1069, %v832
        %v1071 = vpop.permute.xlu0 %1070
        %1073 = vset.pattern.permute.xlu0 1
        %1074 = vperm.xlu0 %1073, %v837
        %v1075 = vpop.permute.xlu0 %1074
        %1077 = vset.pattern.permute.xlu0 1
        %1078 = vperm.xlu0 %1077, %v842
        %v1079 = vpop.permute.xlu0 %1078
        %1081 = vset.pattern.permute.xlu0 1
        %1082 = vperm.xlu0 %1081, %v847
        %v1083 = vpop.permute.xlu0 %1082
        %v1085 = vlaneseq
        %v1086 = vshrl.u32 %v1085, 7
        %v1087 = vsub.s32 0, %v1086
        %v1088 = vrot.slane %v1068, %v1087
        %v1089 = vadd.f32 %v1071, %v1088
        %v1090 = vadd.f32 %v1075, %v1088
        %v1091 = vadd.f32 %v1079, %v1088
        %v1092 = vadd.f32 %v1083, %v1088
        %v1093 = vmul.f32 %v1089, 0.2
        %v1094 = vmul.f32 %v1090, 0.2
        %v1095 = vmul.f32 %v1091, 0.2
        %v1096 = vmul.f32 %v1092, 0.2
        %v1097 = vmax.f32 %v1089, %v1093
        %v1098 = vmax.f32 %v1090, %v1094
        %v1099 = vmax.f32 %v1091, %v1095
        %v1100 = vmax.f32 %v1092, %v1096
        %v1101 = vsel %vm733, %v1097, -9e+15
        %v1102 = vsel %vm734, %v1098, -9e+15
        %v1103 = vsel %vm735, %v1099, -9e+15
        %v1104 = vsel %vm736, %v1100, -9e+15
        %1105 = vmax.xlane.f32.xlu0 %v1101
        %v1106 = vpop.xlane.xlu0 %1105
        %1107 = vmax.xlane.f32.xlu0 %v1102
        %v1108 = vpop.xlane.xlu0 %1107
        %1109 = vmax.xlane.f32.xlu0 %v1103
        %v1110 = vpop.xlane.xlu0 %1109
        %1111 = vmax.xlane.f32.xlu0 %v1104
        %v1112 = vpop.xlane.xlu0 %1111
        %v1113 = vsub.f32 %v1101, %v1106
        %v1114 = vsub.f32 %v1102, %v1108
        %v1115 = vsub.f32 %v1103, %v1110
        %v1116 = vsub.f32 %v1104, %v1112
        %v1117 = vmul.f32 %v1113, 1.442695
        %v1118 = vpow.pop %v1117
        %v1119 = vmul.f32 %v1114, 1.442695
        %v1120 = vpow.pop %v1119
        %v1121 = vmul.f32 %v1115, 1.442695
        %v1122 = vpow.pop %v1121
        %v1123 = vmul.f32 %v1116, 1.442695
        %v1124 = vpow.pop %v1123
        %1141 = vrot.lane.b32.xlu0 %v911, 111
        %v1142 = vpop.permute.xlu0 %1141
        %1143 = vrot.lane.b32.xlu0 %v912, 111
        %v1144 = vpop.permute.xlu0 %1143
        %1145 = vrot.lane.b32.xlu0 %v913, 111
        %v1146 = vpop.permute.xlu0 %1145
        %1147 = vrot.lane.b32.xlu0 %v914, 111
        %v1148 = vpop.permute.xlu0 %1147
        %1149 = vrot.lane.b32.xlu0 %v915, 111
        %v1150 = vpop.permute.xlu0 %1149
        %1151 = vrot.lane.b32.xlu0 %v916, 111
        %v1152 = vpop.permute.xlu0 %1151
        %1153 = vrot.lane.b32.xlu0 %v917, 111
        %v1154 = vpop.permute.xlu0 %1153
        %1155 = vrot.lane.b32.xlu0 %v918, 111
        %v1156 = vpop.permute.xlu0 %1155
        %1157 = vrot.lane.b32.xlu0 %v919, 111
        %v1158 = vpop.permute.xlu0 %1157
        %1159 = vrot.lane.b32.xlu0 %v920, 111
        %v1160 = vpop.permute.xlu0 %1159
        %1161 = vrot.lane.b32.xlu0 %v921, 111
        %v1162 = vpop.permute.xlu0 %1161
        %1163 = vrot.lane.b32.xlu0 %v922, 111
        %v1164 = vpop.permute.xlu0 %1163
        %1165 = vrot.lane.b32.xlu0 %v923, 111
        %v1166 = vpop.permute.xlu0 %1165
        %1167 = vrot.lane.b32.xlu0 %v924, 111
        %v1168 = vpop.permute.xlu0 %1167
        %1169 = vrot.lane.b32.xlu0 %v925, 111
        %v1170 = vpop.permute.xlu0 %1169
        %1171 = vrot.lane.b32.xlu0 %v926, 111
        %v1172 = vpop.permute.xlu0 %1171
        %1189 = vmatprep.subr.mxu0 0.0
        %1190 = vmatpush1.msra.mxu0 %v1142
        %1191 = vmatprep.subr.mxu0 0.0
        %1192 = vmatpush1.msra.mxu0 %v1144
        %1193 = vmatprep.subr.mxu0 0.0
        %1194 = vmatpush1.msra.mxu0 %v1146
        %1195 = vmatprep.subr.mxu0 0.0
        %1196 = vmatpush1.msra.mxu0 %v1148
        %1197 = vmatprep.subr.mxu0 0.0
        %1198 = vmatpush1.msra.mxu0 %v1150
        %1199 = vmatprep.subr.mxu0 0.0
        %1200 = vmatpush1.msra.mxu0 %v1152
        %1201 = vmatprep.subr.mxu0 0.0
        %1202 = vmatpush1.msra.mxu0 %v1154
        %1203 = vmatprep.subr.mxu0 0.0
        %1204 = vmatpush1.msra.mxu0 %v1156
        %1205 = vmatprep.subr.mxu0 0.0
        %1206 = vmatpush1.msra.mxu0 %v1158
        %1207 = vmatprep.subr.mxu0 0.0
        %1208 = vmatpush1.msra.mxu0 %v1160
        %1209 = vmatprep.subr.mxu0 0.0
        %1210 = vmatpush1.msra.mxu0 %v1162
        %1211 = vmatprep.subr.mxu0 0.0
        %1212 = vmatpush1.msra.mxu0 %v1164
        %1213 = vmatprep.subr.mxu0 0.0
        %1214 = vmatpush1.msra.mxu0 %v1166
        %1215 = vmatprep.subr.mxu0 0.0
        %1216 = vmatpush1.msra.mxu0 %v1168
        %1217 = vmatprep.subr.mxu0 0.0
        %1218 = vmatpush1.msra.mxu0 %v1170
        %1219 = vmatprep.subr.mxu0 0.0
        %1220 = vmatpush1.msra.mxu0 %v1172
        %1221 = vmatprep.subr.mxu0 0.0
        %1222 = vmatpush1.msra.mxu0 0.0
        %1223 = vmatprep.subr.mxu0 0.0
        %1224 = vmatpush1.msra.mxu0 0.0
        %1225 = vmatprep.subr.mxu0 0.0
        %1226 = vmatpush1.msra.mxu0 0.0
        %1227 = vmatprep.subr.mxu0 0.0
        %1228 = vmatpush1.msra.mxu0 0.0
        %1229 = vmatprep.subr.mxu0 0.0
        %1230 = vmatpush1.msra.mxu0 0.0
        %1231 = vmatprep.subr.mxu0 0.0
        %1232 = vmatpush1.msra.mxu0 0.0
        %1233 = vmatprep.subr.mxu0 0.0
        %1234 = vmatpush1.msra.mxu0 0.0
        %1235 = vmatprep.subr.mxu0 0.0
        %1236 = vmatpush1.msra.mxu0 0.0
        %1237 = vmatprep.subr.mxu0 0.0
        %1238 = vmatpush1.msra.mxu0 0.0
        %1239 = vmatprep.subr.mxu0 0.0
        %1240 = vmatpush1.msra.mxu0 0.0
        %1241 = vmatprep.subr.mxu0 0.0
        %1242 = vmatpush1.msra.mxu0 0.0
        %1243 = vmatprep.subr.mxu0 0.0
        %1244 = vmatpush1.msra.mxu0 0.0
        %1245 = vmatprep.subr.mxu0 0.0
        %1246 = vmatpush1.msra.mxu0 0.0
        %1247 = vmatprep.subr.mxu0 0.0
        %1248 = vmatpush1.msra.mxu0 0.0
        %1249 = vmatprep.subr.mxu0 0.0
        %1250 = vmatpush1.msra.mxu0 0.0
        %1251 = vmatprep.subr.mxu0 0.0
        %1252 = vmatpush1.msra.mxu0 0.0
        %1253 = vmatprep.mubr.f32.mxu0 0.0
        %1254 = vmatmul.mubr.f32.gmra.mrb[0].mxu0 %v1118
        %v1255 = vpop.f32.mrb[0].mxu0
        %v1256 = vadd.f32 0.0, %v1255
        %v1257 = vpop.f32.mrb[0].mxu0
        %1258 = vmatprep.mubr.f32.mxu0 0.0
        %1259 = vmatmul.mubr.f32.gmra.mrb[0].mxu0 %v1120
        %v1260 = vpop.f32.mrb[0].mxu0
        %v1261 = vadd.f32 0.0, %v1260
        %v1262 = vpop.f32.mrb[0].mxu0
        %1263 = vmatprep.mubr.f32.mxu0 0.0
        %1264 = vmatmul.mubr.f32.gmra.mrb[0].mxu0 %v1122
        %v1265 = vpop.f32.mrb[0].mxu0
        %v1266 = vadd.f32 0.0, %v1265
        %v1267 = vpop.f32.mrb[0].mxu0
        %1268 = vmatprep.mubr.f32.mxu0 0.0
        %1269 = vmatmul.mubr.f32.gmra.mrb[0].mxu0 %v1124
        %v1270 = vpop.f32.mrb[0].mxu0
        %v1271 = vadd.f32 0.0, %v1270
        %v1272 = vpop.f32.mrb[0].mxu0
        %1273 = vdwg.mxu0
        %v1274 = vrcp.pop %v1256
        %v1275 = vmul.f32 1.0, %v1274
        %v1276 = vrcp.pop %v1261
        %v1277 = vmul.f32 1.0, %v1276
        %v1278 = vrcp.pop %v1266
        %v1279 = vmul.f32 1.0, %v1278
        %v1280 = vrcp.pop %v1271
        %v1281 = vmul.f32 1.0, %v1280
        %1283 = vset.pattern.permute.xlu0 16
        %1284 = vperm.xlu0 %1283, %v1275
        %v1285 = vpop.permute.xlu0 %1284
        %1288 = vset.pattern.permute.xlu0 16
        %1289 = vperm.xlu0 %1288, %v1277
        %v1290 = vpop.permute.xlu0 %1289
        %1293 = vset.pattern.permute.xlu0 16
        %1294 = vperm.xlu0 %1293, %v1279
        %v1295 = vpop.permute.xlu0 %1294
        %1298 = vset.pattern.permute.xlu0 16
        %1299 = vperm.xlu0 %1298, %v1281
        %v1300 = vpop.permute.xlu0 %1299
        %v1302 = vmul.f32 %v1256, %v1285
        %v1303 = vmul.f32 %v1261, %v1290
        %v1304 = vmul.f32 %v1266, %v1295
        %v1305 = vmul.f32 %v1271, %v1300
        %vm1306 = vcmp.gt.f32.partialorder %v1302, 0.0
        %vm1307 = vcmp.gt.f32.partialorder %v1303, 0.0
        %vm1308 = vcmp.gt.f32.partialorder %v1304, 0.0
        %vm1309 = vcmp.gt.f32.partialorder %v1305, 0.0
        %v1310 = vmin.f32 %v1302, 0.0
        %v1311 = vmin.f32 %v1303, 0.0
        %v1312 = vmin.f32 %v1304, 0.0
        %v1313 = vmin.f32 %v1305, 0.0
        %v1314 = vmul.f32 %v1310, 1.442695
        %v1315 = vpow.pop %v1314
        %v1316 = vmul.f32 %v1311, 1.442695
        %v1317 = vpow.pop %v1316
        %v1318 = vmul.f32 %v1312, 1.442695
        %v1319 = vpow.pop %v1318
        %v1320 = vmul.f32 %v1313, 1.442695
        %v1321 = vpow.pop %v1320
        %v1322 = vsub.f32 %v1315, 1.0
        %v1323 = vsub.f32 %v1317, 1.0
        %v1324 = vsub.f32 %v1319, 1.0
        %v1325 = vsub.f32 %v1321, 1.0
        %v1326 = vsel %vm1306, %v1302, %v1322
        %v1327 = vsel %vm1307, %v1303, %v1323
        %v1328 = vsel %vm1308, %v1304, %v1324
        %v1329 = vsel %vm1309, %v1305, %v1325
        %v1330 = vld [vmem:[#allocation3 + $0x2] sm:$0x1]
        %1331 = vset.pattern.permute.xlu0 2
        %1332 = vperm.xlu0 %1331, %v832
        %v1333 = vpop.permute.xlu0 %1332
        %1335 = vset.pattern.permute.xlu0 2
        %1336 = vperm.xlu0 %1335, %v837
        %v1337 = vpop.permute.xlu0 %1336
        %1339 = vset.pattern.permute.xlu0 2
        %1340 = vperm.xlu0 %1339, %v842
        %v1341 = vpop.permute.xlu0 %1340
        %1343 = vset.pattern.permute.xlu0 2
        %1344 = vperm.xlu0 %1343, %v847
        %v1345 = vpop.permute.xlu0 %1344
        %v1347 = vlaneseq
        %v1348 = vshrl.u32 %v1347, 7
        %v1349 = vsub.s32 0, %v1348
        %v1350 = vrot.slane %v1330, %v1349
        %v1351 = vadd.f32 %v1333, %v1350
        %v1352 = vadd.f32 %v1337, %v1350
        %v1353 = vadd.f32 %v1341, %v1350
        %v1354 = vadd.f32 %v1345, %v1350
        %v1355 = vmul.f32 %v1351, 0.2
        %v1356 = vmul.f32 %v1352, 0.2
        %v1357 = vmul.f32 %v1353, 0.2
        %v1358 = vmul.f32 %v1354, 0.2
        %v1359 = vmax.f32 %v1351, %v1355
        %v1360 = vmax.f32 %v1352, %v1356
        %v1361 = vmax.f32 %v1353, %v1357
        %v1362 = vmax.f32 %v1354, %v1358
        %v1363 = vsel %vm733, %v1359, -9e+15
        %v1364 = vsel %vm734, %v1360, -9e+15
        %v1365 = vsel %vm735, %v1361, -9e+15
        %v1366 = vsel %vm736, %v1362, -9e+15
        %1367 = vmax.xlane.f32.xlu0 %v1363
        %v1368 = vpop.xlane.xlu0 %1367
        %1369 = vmax.xlane.f32.xlu0 %v1364
        %v1370 = vpop.xlane.xlu0 %1369
        %1371 = vmax.xlane.f32.xlu0 %v1365
        %v1372 = vpop.xlane.xlu0 %1371
        %1373 = vmax.xlane.f32.xlu0 %v1366
        %v1374 = vpop.xlane.xlu0 %1373
        %v1375 = vsub.f32 %v1363, %v1368
        %v1376 = vsub.f32 %v1364, %v1370
        %v1377 = vsub.f32 %v1365, %v1372
        %v1378 = vsub.f32 %v1366, %v1374
        %v1379 = vmul.f32 %v1375, 1.442695
        %v1380 = vpow.pop %v1379
        %v1381 = vmul.f32 %v1376, 1.442695
        %v1382 = vpow.pop %v1381
        %v1383 = vmul.f32 %v1377, 1.442695
        %v1384 = vpow.pop %v1383
        %v1385 = vmul.f32 %v1378, 1.442695
        %v1386 = vpow.pop %v1385
        %1387 = vrot.lane.b32.xlu0 %v911, 94
        %v1388 = vpop.permute.xlu0 %1387
        %1389 = vrot.lane.b32.xlu0 %v912, 94
        %v1390 = vpop.permute.xlu0 %1389
        %1391 = vrot.lane.b32.xlu0 %v913, 94
        %v1392 = vpop.permute.xlu0 %1391
        %1393 = vrot.lane.b32.xlu0 %v914, 94
        %v1394 = vpop.permute.xlu0 %1393
        %1395 = vrot.lane.b32.xlu0 %v915, 94
        %v1396 = vpop.permute.xlu0 %1395
        %1397 = vrot.lane.b32.xlu0 %v916, 94
        %v1398 = vpop.permute.xlu0 %1397
        %1399 = vrot.lane.b32.xlu0 %v917, 94
        %v1400 = vpop.permute.xlu0 %1399
        %1401 = vrot.lane.b32.xlu0 %v918, 94
        %v1402 = vpop.permute.xlu0 %1401
        %1403 = vrot.lane.b32.xlu0 %v919, 94
        %v1404 = vpop.permute.xlu0 %1403
        %1405 = vrot.lane.b32.xlu0 %v920, 94
        %v1406 = vpop.permute.xlu0 %1405
        %1407 = vrot.lane.b32.xlu0 %v921, 94
        %v1408 = vpop.permute.xlu0 %1407
        %1409 = vrot.lane.b32.xlu0 %v922, 94
        %v1410 = vpop.permute.xlu0 %1409
        %1411 = vrot.lane.b32.xlu0 %v923, 94
        %v1412 = vpop.permute.xlu0 %1411
        %1413 = vrot.lane.b32.xlu0 %v924, 94
        %v1414 = vpop.permute.xlu0 %1413
        %1415 = vrot.lane.b32.xlu0 %v925, 94
        %v1416 = vpop.permute.xlu0 %1415
        %1417 = vrot.lane.b32.xlu0 %v926, 94
        %v1418 = vpop.permute.xlu0 %1417
        %1435 = vmatprep.subr.mxu0 0.0
        %1436 = vmatpush1.msra.mxu0 %v1388
        %1437 = vmatprep.subr.mxu0 0.0
        %1438 = vmatpush1.msra.mxu0 %v1390
        %1439 = vmatprep.subr.mxu0 0.0
        %1440 = vmatpush1.msra.mxu0 %v1392
        %1441 = vmatprep.subr.mxu0 0.0
        %1442 = vmatpush1.msra.mxu0 %v1394
        %1443 = vmatprep.subr.mxu0 0.0
        %1444 = vmatpush1.msra.mxu0 %v1396
        %1445 = vmatprep.subr.mxu0 0.0
        %1446 = vmatpush1.msra.mxu0 %v1398
        %1447 = vmatprep.subr.mxu0 0.0
        %1448 = vmatpush1.msra.mxu0 %v1400
        %1449 = vmatprep.subr.mxu0 0.0
        %1450 = vmatpush1.msra.mxu0 %v1402
        %1451 = vmatprep.subr.mxu0 0.0
        %1452 = vmatpush1.msra.mxu0 %v1404
        %1453 = vmatprep.subr.mxu0 0.0
        %1454 = vmatpush1.msra.mxu0 %v1406
        %1455 = vmatprep.subr.mxu0 0.0
        %1456 = vmatpush1.msra.mxu0 %v1408
        %1457 = vmatprep.subr.mxu0 0.0
        %1458 = vmatpush1.msra.mxu0 %v1410
        %1459 = vmatprep.subr.mxu0 0.0
        %1460 = vmatpush1.msra.mxu0 %v1412
        %1461 = vmatprep.subr.mxu0 0.0
        %1462 = vmatpush1.msra.mxu0 %v1414
        %1463 = vmatprep.subr.mxu0 0.0
        %1464 = vmatpush1.msra.mxu0 %v1416
        %1465 = vmatprep.subr.mxu0 0.0
        %1466 = vmatpush1.msra.mxu0 %v1418
        %1467 = vmatprep.subr.mxu0 0.0
        %1468 = vmatpush1.msra.mxu0 0.0
        %1469 = vmatprep.subr.mxu0 0.0
        %1470 = vmatpush1.msra.mxu0 0.0
        %1471 = vmatprep.subr.mxu0 0.0
        %1472 = vmatpush1.msra.mxu0 0.0
        %1473 = vmatprep.subr.mxu0 0.0
        %1474 = vmatpush1.msra.mxu0 0.0
        %1475 = vmatprep.subr.mxu0 0.0
        %1476 = vmatpush1.msra.mxu0 0.0
        %1477 = vmatprep.subr.mxu0 0.0
        %1478 = vmatpush1.msra.mxu0 0.0
        %1479 = vmatprep.subr.mxu0 0.0
        %1480 = vmatpush1.msra.mxu0 0.0
        %1481 = vmatprep.subr.mxu0 0.0
        %1482 = vmatpush1.msra.mxu0 0.0
        %1483 = vmatprep.subr.mxu0 0.0
        %1484 = vmatpush1.msra.mxu0 0.0
        %1485 = vmatprep.subr.mxu0 0.0
        %1486 = vmatpush1.msra.mxu0 0.0
        %1487 = vmatprep.subr.mxu0 0.0
        %1488 = vmatpush1.msra.mxu0 0.0
        %1489 = vmatprep.subr.mxu0 0.0
        %1490 = vmatpush1.msra.mxu0 0.0
        %1491 = vmatprep.subr.mxu0 0.0
        %1492 = vmatpush1.msra.mxu0 0.0
        %1493 = vmatprep.subr.mxu0 0.0
        %1494 = vmatpush1.msra.mxu0 0.0
        %1495 = vmatprep.subr.mxu0 0.0
        %1496 = vmatpush1.msra.mxu0 0.0
        %1497 = vmatprep.subr.mxu0 0.0
        %1498 = vmatpush1.msra.mxu0 0.0
        %1499 = vmatprep.mubr.f32.mxu0 0.0
        %1500 = vmatmul.mubr.f32.gmra.mrb[0].mxu0 %v1380
        %v1501 = vpop.f32.mrb[0].mxu0
        %v1502 = vadd.f32 0.0, %v1501
        %v1503 = vpop.f32.mrb[0].mxu0
        %1504 = vmatprep.mubr.f32.mxu0 0.0
        %1505 = vmatmul.mubr.f32.gmra.mrb[0].mxu0 %v1382
        %v1506 = vpop.f32.mrb[0].mxu0
        %v1507 = vadd.f32 0.0, %v1506
        %v1508 = vpop.f32.mrb[0].mxu0
        %1509 = vmatprep.mubr.f32.mxu0 0.0
        %1510 = vmatmul.mubr.f32.gmra.mrb[0].mxu0 %v1384
        %v1511 = vpop.f32.mrb[0].mxu0
        %v1512 = vadd.f32 0.0, %v1511
        %v1513 = vpop.f32.mrb[0].mxu0
        %1514 = vmatprep.mubr.f32.mxu0 0.0
        %1515 = vmatmul.mubr.f32.gmra.mrb[0].mxu0 %v1386
        %v1516 = vpop.f32.mrb[0].mxu0
        %v1517 = vadd.f32 0.0, %v1516
        %v1518 = vpop.f32.mrb[0].mxu0
        %1519 = vdwg.mxu0
        %v1520 = vrcp.pop %v1502
        %v1521 = vmul.f32 1.0, %v1520
        %v1522 = vrcp.pop %v1507
        %v1523 = vmul.f32 1.0, %v1522
        %v1524 = vrcp.pop %v1512
        %v1525 = vmul.f32 1.0, %v1524
        %v1526 = vrcp.pop %v1517
        %v1527 = vmul.f32 1.0, %v1526
        %1529 = vset.pattern.permute.xlu0 16
        %1530 = vperm.xlu0 %1529, %v1521
        %v1531 = vpop.permute.xlu0 %1530
        %1534 = vset.pattern.permute.xlu0 16
        %1535 = vperm.xlu0 %1534, %v1523
        %v1536 = vpop.permute.xlu0 %1535
        %1539 = vset.pattern.permute.xlu0 16
        %1540 = vperm.xlu0 %1539, %v1525
        %v1541 = vpop.permute.xlu0 %1540
        %1544 = vset.pattern.permute.xlu0 16
        %1545 = vperm.xlu0 %1544, %v1527
        %v1546 = vpop.permute.xlu0 %1545
        %v1548 = vmul.f32 %v1502, %v1531
        %v1549 = vmul.f32 %v1507, %v1536
        %v1550 = vmul.f32 %v1512, %v1541
        %v1551 = vmul.f32 %v1517, %v1546
        %vm1552 = vcmp.gt.f32.partialorder %v1548, 0.0
        %vm1553 = vcmp.gt.f32.partialorder %v1549, 0.0
        %vm1554 = vcmp.gt.f32.partialorder %v1550, 0.0
        %vm1555 = vcmp.gt.f32.partialorder %v1551, 0.0
        %v1556 = vmin.f32 %v1548, 0.0
        %v1557 = vmin.f32 %v1549, 0.0
        %v1558 = vmin.f32 %v1550, 0.0
        %v1559 = vmin.f32 %v1551, 0.0
        %v1560 = vmul.f32 %v1556, 1.442695
        %v1561 = vpow.pop %v1560
        %v1562 = vmul.f32 %v1557, 1.442695
        %v1563 = vpow.pop %v1562
        %v1564 = vmul.f32 %v1558, 1.442695
        %v1565 = vpow.pop %v1564
        %v1566 = vmul.f32 %v1559, 1.442695
        %v1567 = vpow.pop %v1566
        %v1568 = vsub.f32 %v1561, 1.0
        %v1569 = vsub.f32 %v1563, 1.0
        %v1570 = vsub.f32 %v1565, 1.0
        %v1571 = vsub.f32 %v1567, 1.0
        %v1572 = vsel %vm1552, %v1548, %v1568
        %v1573 = vsel %vm1553, %v1549, %v1569
        %v1574 = vsel %vm1554, %v1550, %v1570
        %v1575 = vsel %vm1555, %v1551, %v1571
        %v1576 = vld [vmem:[#allocation3 + $0x3] sm:$0x1]
        %1577 = vset.pattern.permute.xlu0 3
        %1578 = vperm.xlu0 %1577, %v832
        %v1579 = vpop.permute.xlu0 %1578
        %1581 = vset.pattern.permute.xlu0 3
        %1582 = vperm.xlu0 %1581, %v837
        %v1583 = vpop.permute.xlu0 %1582
        %1585 = vset.pattern.permute.xlu0 3
        %1586 = vperm.xlu0 %1585, %v842
        %v1587 = vpop.permute.xlu0 %1586
        %1589 = vset.pattern.permute.xlu0 3
        %1590 = vperm.xlu0 %1589, %v847
        %v1591 = vpop.permute.xlu0 %1590
        %v1593 = vlaneseq
        %v1594 = vshrl.u32 %v1593, 7
        %v1595 = vsub.s32 0, %v1594
        %v1596 = vrot.slane %v1576, %v1595
        %v1597 = vadd.f32 %v1579, %v1596
        %v1598 = vadd.f32 %v1583, %v1596
        %v1599 = vadd.f32 %v1587, %v1596
        %v1600 = vadd.f32 %v1591, %v1596
        %v1601 = vmul.f32 %v1597, 0.2
        %v1602 = vmul.f32 %v1598, 0.2
        %v1603 = vmul.f32 %v1599, 0.2
        %v1604 = vmul.f32 %v1600, 0.2
        %v1605 = vmax.f32 %v1597, %v1601
        %v1606 = vmax.f32 %v1598, %v1602
        %v1607 = vmax.f32 %v1599, %v1603
        %v1608 = vmax.f32 %v1600, %v1604
        %v1609 = vsel %vm733, %v1605, -9e+15
        %v1610 = vsel %vm734, %v1606, -9e+15
        %v1611 = vsel %vm735, %v1607, -9e+15
        %v1612 = vsel %vm736, %v1608, -9e+15
        %1613 = vmax.xlane.f32.xlu0 %v1609
        %v1614 = vpop.xlane.xlu0 %1613
        %1615 = vmax.xlane.f32.xlu0 %v1610
        %v1616 = vpop.xlane.xlu0 %1615
        %1617 = vmax.xlane.f32.xlu0 %v1611
        %v1618 = vpop.xlane.xlu0 %1617
        %1619 = vmax.xlane.f32.xlu0 %v1612
        %v1620 = vpop.xlane.xlu0 %1619
        %v1621 = vsub.f32 %v1609, %v1614
        %v1622 = vsub.f32 %v1610, %v1616
        %v1623 = vsub.f32 %v1611, %v1618
        %v1624 = vsub.f32 %v1612, %v1620
        %v1625 = vmul.f32 %v1621, 1.442695
        %v1626 = vpow.pop %v1625
        %v1627 = vmul.f32 %v1622, 1.442695
        %v1628 = vpow.pop %v1627
        %v1629 = vmul.f32 %v1623, 1.442695
        %v1630 = vpow.pop %v1629
        %v1631 = vmul.f32 %v1624, 1.442695
        %v1632 = vpow.pop %v1631
        %1633 = vrot.lane.b32.xlu0 %v911, 77
        %v1634 = vpop.permute.xlu0 %1633
        %1635 = vrot.lane.b32.xlu0 %v912, 77
        %v1636 = vpop.permute.xlu0 %1635
        %1637 = vrot.lane.b32.xlu0 %v913, 77
        %v1638 = vpop.permute.xlu0 %1637
        %1639 = vrot.lane.b32.xlu0 %v914, 77
        %v1640 = vpop.permute.xlu0 %1639
        %1641 = vrot.lane.b32.xlu0 %v915, 77
        %v1642 = vpop.permute.xlu0 %1641
        %1643 = vrot.lane.b32.xlu0 %v916, 77
        %v1644 = vpop.permute.xlu0 %1643
        %1645 = vrot.lane.b32.xlu0 %v917, 77
        %v1646 = vpop.permute.xlu0 %1645
        %1647 = vrot.lane.b32.xlu0 %v918, 77
        %v1648 = vpop.permute.xlu0 %1647
        %1649 = vrot.lane.b32.xlu0 %v919, 77
        %v1650 = vpop.permute.xlu0 %1649
        %1651 = vrot.lane.b32.xlu0 %v920, 77
        %v1652 = vpop.permute.xlu0 %1651
        %1653 = vrot.lane.b32.xlu0 %v921, 77
        %v1654 = vpop.permute.xlu0 %1653
        %1655 = vrot.lane.b32.xlu0 %v922, 77
        %v1656 = vpop.permute.xlu0 %1655
        %1657 = vrot.lane.b32.xlu0 %v923, 77
        %v1658 = vpop.permute.xlu0 %1657
        %1659 = vrot.lane.b32.xlu0 %v924, 77
        %v1660 = vpop.permute.xlu0 %1659
        %1661 = vrot.lane.b32.xlu0 %v925, 77
        %v1662 = vpop.permute.xlu0 %1661
        %1663 = vrot.lane.b32.xlu0 %v926, 77
        %v1664 = vpop.permute.xlu0 %1663
        %1681 = vmatprep.subr.mxu0 0.0
        %1682 = vmatpush1.msra.mxu0 %v1634
        %1683 = vmatprep.subr.mxu0 0.0
        %1684 = vmatpush1.msra.mxu0 %v1636
        %1685 = vmatprep.subr.mxu0 0.0
        %1686 = vmatpush1.msra.mxu0 %v1638
        %1687 = vmatprep.subr.mxu0 0.0
        %1688 = vmatpush1.msra.mxu0 %v1640
        %1689 = vmatprep.subr.mxu0 0.0
        %1690 = vmatpush1.msra.mxu0 %v1642
        %1691 = vmatprep.subr.mxu0 0.0
        %1692 = vmatpush1.msra.mxu0 %v1644
        %1693 = vmatprep.subr.mxu0 0.0
        %1694 = vmatpush1.msra.mxu0 %v1646
        %1695 = vmatprep.subr.mxu0 0.0
        %1696 = vmatpush1.msra.mxu0 %v1648
        %1697 = vmatprep.subr.mxu0 0.0
        %1698 = vmatpush1.msra.mxu0 %v1650
        %1699 = vmatprep.subr.mxu0 0.0
        %1700 = vmatpush1.msra.mxu0 %v1652
        %1701 = vmatprep.subr.mxu0 0.0
        %1702 = vmatpush1.msra.mxu0 %v1654
        %1703 = vmatprep.subr.mxu0 0.0
        %1704 = vmatpush1.msra.mxu0 %v1656
        %1705 = vmatprep.subr.mxu0 0.0
        %1706 = vmatpush1.msra.mxu0 %v1658
        %1707 = vmatprep.subr.mxu0 0.0
        %1708 = vmatpush1.msra.mxu0 %v1660
        %1709 = vmatprep.subr.mxu0 0.0
        %1710 = vmatpush1.msra.mxu0 %v1662
        %1711 = vmatprep.subr.mxu0 0.0
        %1712 = vmatpush1.msra.mxu0 %v1664
        %1713 = vmatprep.subr.mxu0 0.0
        %1714 = vmatpush1.msra.mxu0 0.0
        %1715 = vmatprep.subr.mxu0 0.0
        %1716 = vmatpush1.msra.mxu0 0.0
        %1717 = vmatprep.subr.mxu0 0.0
        %1718 = vmatpush1.msra.mxu0 0.0
        %1719 = vmatprep.subr.mxu0 0.0
        %1720 = vmatpush1.msra.mxu0 0.0
        %1721 = vmatprep.subr.mxu0 0.0
        %1722 = vmatpush1.msra.mxu0 0.0
        %1723 = vmatprep.subr.mxu0 0.0
        %1724 = vmatpush1.msra.mxu0 0.0
        %1725 = vmatprep.subr.mxu0 0.0
        %1726 = vmatpush1.msra.mxu0 0.0
        %1727 = vmatprep.subr.mxu0 0.0
        %1728 = vmatpush1.msra.mxu0 0.0
        %1729 = vmatprep.subr.mxu0 0.0
        %1730 = vmatpush1.msra.mxu0 0.0
        %1731 = vmatprep.subr.mxu0 0.0
        %1732 = vmatpush1.msra.mxu0 0.0
        %1733 = vmatprep.subr.mxu0 0.0
        %1734 = vmatpush1.msra.mxu0 0.0
        %1735 = vmatprep.subr.mxu0 0.0
        %1736 = vmatpush1.msra.mxu0 0.0
        %1737 = vmatprep.subr.mxu0 0.0
        %1738 = vmatpush1.msra.mxu0 0.0
        %1739 = vmatprep.subr.mxu0 0.0
        %1740 = vmatpush1.msra.mxu0 0.0
        %1741 = vmatprep.subr.mxu0 0.0
        %1742 = vmatpush1.msra.mxu0 0.0
        %1743 = vmatprep.subr.mxu0 0.0
        %1744 = vmatpush1.msra.mxu0 0.0
        %1745 = vmatprep.mubr.f32.mxu0 0.0
        %1746 = vmatmul.mubr.f32.gmra.mrb[0].mxu0 %v1626
        %v1747 = vpop.f32.mrb[0].mxu0
        %v1748 = vadd.f32 0.0, %v1747
        %v1749 = vpop.f32.mrb[0].mxu0
        %1750 = vmatprep.mubr.f32.mxu0 0.0
        %1751 = vmatmul.mubr.f32.gmra.mrb[0].mxu0 %v1628
        %v1752 = vpop.f32.mrb[0].mxu0
        %v1753 = vadd.f32 0.0, %v1752
        %v1754 = vpop.f32.mrb[0].mxu0
        %1755 = vmatprep.mubr.f32.mxu0 0.0
        %1756 = vmatmul.mubr.f32.gmra.mrb[0].mxu0 %v1630
        %v1757 = vpop.f32.mrb[0].mxu0
        %v1758 = vadd.f32 0.0, %v1757
        %v1759 = vpop.f32.mrb[0].mxu0
        %1760 = vmatprep.mubr.f32.mxu0 0.0
        %1761 = vmatmul.mubr.f32.gmra.mrb[0].mxu0 %v1632
        %v1762 = vpop.f32.mrb[0].mxu0
        %v1763 = vadd.f32 0.0, %v1762
        %v1764 = vpop.f32.mrb[0].mxu0
        %1765 = vdwg.mxu0
        %v1766 = vrcp.pop %v1748
        %v1767 = vmul.f32 1.0, %v1766
        %v1768 = vrcp.pop %v1753
        %v1769 = vmul.f32 1.0, %v1768
        %v1770 = vrcp.pop %v1758
        %v1771 = vmul.f32 1.0, %v1770
        %v1772 = vrcp.pop %v1763
        %v1773 = vmul.f32 1.0, %v1772
        %1775 = vset.pattern.permute.xlu0 16
        %1776 = vperm.xlu0 %1775, %v1767
        %v1777 = vpop.permute.xlu0 %1776
        %1780 = vset.pattern.permute.xlu0 16
        %1781 = vperm.xlu0 %1780, %v1769
        %v1782 = vpop.permute.xlu0 %1781
        %1785 = vset.pattern.permute.xlu0 16
        %1786 = vperm.xlu0 %1785, %v1771
        %v1787 = vpop.permute.xlu0 %1786
        %1790 = vset.pattern.permute.xlu0 16
        %1791 = vperm.xlu0 %1790, %v1773
        %v1792 = vpop.permute.xlu0 %1791
        %v1794 = vmul.f32 %v1748, %v1777
        %v1795 = vmul.f32 %v1753, %v1782
        %v1796 = vmul.f32 %v1758, %v1787
        %v1797 = vmul.f32 %v1763, %v1792
        %vm1798 = vcmp.gt.f32.partialorder %v1794, 0.0
        %vm1799 = vcmp.gt.f32.partialorder %v1795, 0.0
        %vm1800 = vcmp.gt.f32.partialorder %v1796, 0.0
        %vm1801 = vcmp.gt.f32.partialorder %v1797, 0.0
        %v1802 = vmin.f32 %v1794, 0.0
        %v1803 = vmin.f32 %v1795, 0.0
        %v1804 = vmin.f32 %v1796, 0.0
        %v1805 = vmin.f32 %v1797, 0.0
        %v1806 = vmul.f32 %v1802, 1.442695
        %v1807 = vpow.pop %v1806
        %v1808 = vmul.f32 %v1803, 1.442695
        %v1809 = vpow.pop %v1808
        %v1810 = vmul.f32 %v1804, 1.442695
        %v1811 = vpow.pop %v1810
        %v1812 = vmul.f32 %v1805, 1.442695
        %v1813 = vpow.pop %v1812
        %v1814 = vsub.f32 %v1807, 1.0
        %v1815 = vsub.f32 %v1809, 1.0
        %v1816 = vsub.f32 %v1811, 1.0
        %v1817 = vsub.f32 %v1813, 1.0
        %v1818 = vsel %vm1798, %v1794, %v1814
        %v1819 = vsel %vm1799, %v1795, %v1815
        %v1820 = vsel %vm1800, %v1796, %v1816
        %v1821 = vsel %vm1801, %v1797, %v1817
        %1826 = vrot.lane.b32.xlu0 %v1326, 16
        %v1827 = vpop.permute.xlu0 %1826
        %1828 = vrot.lane.b32.xlu0 %v1327, 16
        %v1829 = vpop.permute.xlu0 %1828
        %1830 = vrot.lane.b32.xlu0 %v1328, 16
        %v1831 = vpop.permute.xlu0 %1830
        %1832 = vrot.lane.b32.xlu0 %v1329, 16
        %v1833 = vpop.permute.xlu0 %1832
        %1842 = vrot.lane.b32.xlu0 %v1572, 32
        %v1843 = vpop.permute.xlu0 %1842
        %1844 = vrot.lane.b32.xlu0 %v1573, 32
        %v1845 = vpop.permute.xlu0 %1844
        %1846 = vrot.lane.b32.xlu0 %v1574, 32
        %v1847 = vpop.permute.xlu0 %1846
        %1848 = vrot.lane.b32.xlu0 %v1575, 32
        %v1849 = vpop.permute.xlu0 %1848
        %1858 = vrot.lane.b32.xlu0 %v1818, 48
        %v1859 = vpop.permute.xlu0 %1858
        %1860 = vrot.lane.b32.xlu0 %v1819, 48
        %v1861 = vpop.permute.xlu0 %1860
        %1862 = vrot.lane.b32.xlu0 %v1820, 48
        %v1863 = vpop.permute.xlu0 %1862
        %1864 = vrot.lane.b32.xlu0 %v1821, 48
        %v1865 = vpop.permute.xlu0 %1864
        %vm1870 = vcmask 130048
        %v1871 = vsel %vm1870, %v1064, %v1827
        %v1872 = vsel %vm1870, %v1065, %v1829
        %v1873 = vsel %vm1870, %v1066, %v1831
        %v1874 = vsel %vm1870, %v1067, %v1833
        %vm1875 = vcmask 261120
        %v1876 = vsel %vm1875, %v1871, %v1843
        %v1877 = vsel %vm1875, %v1872, %v1845
        %v1878 = vsel %vm1875, %v1873, %v1847
        %v1879 = vsel %vm1875, %v1874, %v1849
        %vm1880 = vcmask 392192
        %v1881 = vsel %vm1880, %v1876, %v1859
        %v1882 = vsel %vm1880, %v1877, %v1861
        %v1883 = vsel %vm1880, %v1878, %v1863
        %v1884 = vsel %vm1880, %v1879, %v1865
        %v1885 = vld [vmem:[%s3] sm:$0xff]
        %v1886 = vld [vmem:[%s3 + $0x8] sm:$0xff]
        %v1887 = vld [vmem:[%s3 + $0x10] sm:$0xff]
        %v1888 = vld [vmem:[%s3 + $0x18] sm:$0xff]
        %v1889 = vld [vmem:[%s3 + $0x20] sm:$0xff]
        %v1890 = vld [vmem:[%s3 + $0x28] sm:$0xff]
        %v1891 = vld [vmem:[%s3 + $0x30] sm:$0xff]
        %v1892 = vld [vmem:[%s3 + $0x38] sm:$0xff]
        %v1893 = vld [vmem:[%s4] sm:$0x1]
        %v1895 = vlaneseq
        %v1896 = vshrl.u32 %v1895, 7
        %v1897 = vsub.s32 0, %v1896
        %v1898 = vrot.slane %v1893, %v1897
        %vm1900 = vcmask 523264
        %v1902 = vsel %vm1900, %v1881, 0
        %v1905 = vsel %vm1900, %v1882, 0
        %v1908 = vsel %vm1900, %v1883, 0
        %v1911 = vsel %vm1900, %v1884, 0
        %1913 = vmatprep.subr.mxu0 0.0
        %1914 = vmatpush1.msra.mxu0 %v1885
        %1915 = vmatprep.subr.mxu0 0.0
        %1916 = vmatpush1.msra.mxu0 %v1886
        %1917 = vmatprep.subr.mxu0 0.0
        %1918 = vmatpush1.msra.mxu0 %v1887
        %1919 = vmatprep.subr.mxu0 0.0
        %1920 = vmatpush1.msra.mxu0 %v1888
        %1921 = vmatprep.subr.mxu0 0.0
        %1922 = vmatpush1.msra.mxu0 %v1889
        %1923 = vmatprep.subr.mxu0 0.0
        %1924 = vmatpush1.msra.mxu0 %v1890
        %1925 = vmatprep.subr.mxu0 0.0
        %1926 = vmatpush1.msra.mxu0 %v1891
        %1927 = vmatprep.subr.mxu0 0.0
        %1928 = vmatpush1.msra.mxu0 %v1892
        %1929 = vmatprep.subr.mxu0 0.0
        %1930 = vmatpush1.msra.mxu0 0.0
        %1931 = vmatprep.subr.mxu0 0.0
        %1932 = vmatpush1.msra.mxu0 0.0
        %1933 = vmatprep.subr.mxu0 0.0
        %1934 = vmatpush1.msra.mxu0 0.0
        %1935 = vmatprep.subr.mxu0 0.0
        %1936 = vmatpush1.msra.mxu0 0.0
        %1937 = vmatprep.subr.mxu0 0.0
        %1938 = vmatpush1.msra.mxu0 0.0
        %1939 = vmatprep.subr.mxu0 0.0
        %1940 = vmatpush1.msra.mxu0 0.0
        %1941 = vmatprep.subr.mxu0 0.0
        %1942 = vmatpush1.msra.mxu0 0.0
        %1943 = vmatprep.subr.mxu0 0.0
        %1944 = vmatpush1.msra.mxu0 0.0
        %1945 = vmatprep.subr.mxu0 0.0
        %1946 = vmatpush1.msra.mxu0 0.0
        %1947 = vmatprep.subr.mxu0 0.0
        %1948 = vmatpush1.msra.mxu0 0.0
        %1949 = vmatprep.subr.mxu0 0.0
        %1950 = vmatpush1.msra.mxu0 0.0
        %1951 = vmatprep.subr.mxu0 0.0
        %1952 = vmatpush1.msra.mxu0 0.0
        %1953 = vmatprep.subr.mxu0 0.0
        %1954 = vmatpush1.msra.mxu0 0.0
        %1955 = vmatprep.subr.mxu0 0.0
        %1956 = vmatpush1.msra.mxu0 0.0
        %1957 = vmatprep.subr.mxu0 0.0
        %1958 = vmatpush1.msra.mxu0 0.0
        %1959 = vmatprep.subr.mxu0 0.0
        %1960 = vmatpush1.msra.mxu0 0.0
        %1961 = vmatprep.subr.mxu0 0.0
        %1962 = vmatpush1.msra.mxu0 0.0
        %1963 = vmatprep.subr.mxu0 0.0
        %1964 = vmatpush1.msra.mxu0 0.0
        %1965 = vmatprep.subr.mxu0 0.0
        %1966 = vmatpush1.msra.mxu0 0.0
        %1967 = vmatprep.subr.mxu0 0.0
        %1968 = vmatpush1.msra.mxu0 0.0
        %1969 = vmatprep.subr.mxu0 0.0
        %1970 = vmatpush1.msra.mxu0 0.0
        %1971 = vmatprep.subr.mxu0 0.0
        %1972 = vmatpush1.msra.mxu0 0.0
        %1973 = vmatprep.subr.mxu0 0.0
        %1974 = vmatpush1.msra.mxu0 0.0
        %1975 = vmatprep.subr.mxu0 0.0
        %1976 = vmatpush1.msra.mxu0 0.0
        %1977 = vmatprep.mubr.f32.mxu0 0.0
        %1978 = vmatmul.mubr.f32.gmra.mrb[0].mxu0 %v1902
        %v1979 = vpop.f32.mrb[0].mxu0
        %v1980 = vadd.f32 %v1898, %v1979
        %v1981 = vpop.f32.mrb[0].mxu0
        %1982 = vmatprep.mubr.f32.mxu0 0.0
        %1983 = vmatmul.mubr.f32.gmra.mrb[0].mxu0 %v1905
        %v1984 = vpop.f32.mrb[0].mxu0
        %v1985 = vadd.f32 %v1898, %v1984
        %v1986 = vpop.f32.mrb[0].mxu0
        %1987 = vmatprep.mubr.f32.mxu0 0.0
        %1988 = vmatmul.mubr.f32.gmra.mrb[0].mxu0 %v1908
        %v1989 = vpop.f32.mrb[0].mxu0
        %v1990 = vadd.f32 %v1898, %v1989
        %v1991 = vpop.f32.mrb[0].mxu0
        %1992 = vmatprep.mubr.f32.mxu0 0.0
        %1993 = vmatmul.mubr.f32.gmra.mrb[0].mxu0 %v1911
        %v1994 = vpop.f32.mrb[0].mxu0
        %v1995 = vadd.f32 %v1898, %v1994
        %v1996 = vpop.f32.mrb[0].mxu0
        %1997 = vdwg.mxu0
        %v1998 = vtanh.pop %v1980
        %v1999 = vtanh.pop %v1985
        %v2000 = vtanh.pop %v1990
        %v2001 = vtanh.pop %v1995
        %v2002 = vld [vmem:[%s5] sm:$0x1]
        %v2004 = vlaneseq
        %v2005 = vshrl.u32 %v2004, 7
        %v2006 = vsub.s32 0, %v2005
        %v2007 = vrot.slane %v2002, %v2006
        %v2009 = vmul.f32 %v1998, %v2007
        %v2010 = vmul.f32 %v1999, %v2007
        %v2011 = vmul.f32 %v2000, %v2007
        %v2012 = vmul.f32 %v2001, %v2007
        %v2013 = vsel %vm1870, %v2009, 0.0
        %2014 = vadd.xlane.f32.xlu0 %v2013
        %v2015 = vpop.xlane.xlu0 %2014
        %v2016 = vsel %vm1870, %v2010, 0.0
        %2017 = vadd.xlane.f32.xlu0 %v2016
        %v2018 = vpop.xlane.xlu0 %2017
        %v2019 = vsel %vm1870, %v2011, 0.0
        %2020 = vadd.xlane.f32.xlu0 %v2019
        %v2021 = vpop.xlane.xlu0 %2020
        %v2022 = vsel %vm1870, %v2012, 0.0
        %2023 = vadd.xlane.f32.xlu0 %v2022
        %v2024 = vpop.xlane.xlu0 %2023
        %v2025 = vadd.f32 %v2015, %v2018
        %v2026 = vadd.f32 %v2025, %v2021
        %v2027 = vadd.f32 %v2026, %v2024
        %v2028 = vrot.slane %v2027, 4
        %v2029 = vadd.f32 %v2027, %v2028
        %v2030 = vrot.slane %v2029, 2
        %v2031 = vadd.f32 %v2029, %v2030
        %v2032 = vrot.slane %v2031, 1
        %v2033 = vadd.f32 %v2031, %v2032
        %v2034 = vld [vmem:[%s361] sm:$0x1]
        %v2035 = vadd.f32 %v2034, %v2033
        %2036 = vst [vmem:[%s361] sm:$0x1] %v2035
        %2037 = vst.msk [vmem:[%s388] sm:$0xff] %vm1900, %v1881
        %2038 = vst.msk [vmem:[%s388 + $0x8] sm:$0xff] %vm1900, %v1882
        %2039 = vst.msk [vmem:[%s388 + $0x10] sm:$0xff] %vm1900, %v1883
        %2040 = vst.msk [vmem:[%s388 + $0x18] sm:$0xff] %vm1900, %v1884
        %s2041 = smul.u32 4, %s28
        %p2042 = scmp.lt.s32.totalorder %s27, 1
        %s2043 = scalar_select %p2042, %s27, 1
        %p2044 = scmp.lt.s32.totalorder %s2041, 15
        %s2045 = scalar_select %p2044, %s2041, 15
        %s2046 = smul.addr %s2043, 16
        %s2047 = sadd.s32 %s2045, %s2046
        %s2048 = smul.addr %s2047, 8
        %s2049 = scalar_lea.vmem %s7, %s2048
        %s2050 = sand.u32 %s235, 1
        %s2051 = scalar_lea.sflag [#allocation5], %s2050
        %s2052 = sand.u32 %s235, 1
        %s2053 = scalar_lea.vmem [#allocation4], %s2052
        // Predicated region
        $region53: #{tpu_custom_call.1} parent=47 // pred_check
          %p2054 = pneg %p219
        $region54: #{tpu_custom_call.1} parent=47 // pred_check_branch
          %2056 = sbr.rel (%p2054) target = $region56
        $region55: #{tpu_custom_call.1} parent=47 // pred_region
          %s2057 = smul.u32 4, %s28
        $region56: #{tpu_custom_call.1} parent=47 // pred_fallthru
          _
        // Predicated region
        $region57: #{tpu_custom_call.1} parent=47 // pred_check
          %p2058 = pneg %p245
        $region58: #{tpu_custom_call.1} parent=47 // pred_check_branch
          %2060 = sbr.rel (%p2058) target = $region60
        $region59: #{tpu_custom_call.1} parent=47 // pred_region
          %s2062 = ssub.s32 16, 16
          %2063 = vsyncadd %s2051, %s2062
          %s2064 = smul.addr %s27, 16
          %s2065 = scalar_lea.hbm %s8, %s2064
          %s2067 = sshll.u32 %s2053, 4
          %s2068 = int_to_ptr.vmem [resolvable:$true] %s2067
          %2070 = dma.vmem_to_hbm [thread:$0]  %s2068, 16, %s2065, %s2051
        $region60: #{tpu_custom_call.1} parent=47 // pred_fallthru
          _
      $region48: #{tpu_custom_call.1} parent=5 // pred_fallthru
        _
      %p2071 = scmp.le.s32.totalorder 2, %s18
      // Predicated region
      $region61: #{tpu_custom_call.1} parent=5 // pred_check
        %p2072 = pneg %p2071
      $region62: #{tpu_custom_call.1} parent=5 // pred_check_branch
        %2074 = sbr.rel (%p2072) target = $region64
      $region63: #{tpu_custom_call.1} parent=5 // pred_region
        %s2075 = ssub.s32 %s18, 2
        // Predicated region
        $region65: #{tpu_custom_call.1} parent=63 // pred_check
          %p2076 = pneg %p225
        $region66: #{tpu_custom_call.1} parent=63 // pred_check_branch
          %2078 = sbr.rel (%p2076) target = $region68
        $region67: #{tpu_custom_call.1} parent=63 // pred_region
          %s2079 = smul.u32 4, %s30
          %p2080 = scmp.lt.s32.totalorder %s29, 1
          %s2081 = scalar_select %p2080, %s29, 1
          %p2082 = scmp.lt.s32.totalorder %s2079, 15
          %s2083 = scalar_select %p2082, %s2079, 15
          %s2084 = smul.addr %s2081, 16
          %s2085 = sadd.s32 %s2083, %s2084
          %s2086 = smul.addr %s2085, 8
          %s2087 = scalar_lea.vmem %s7, %s2086
        $region68: #{tpu_custom_call.1} parent=63 // pred_fallthru
          _
        // Predicated region
        $region69: #{tpu_custom_call.1} parent=63 // pred_check
          %p2088 = pneg %p251
        $region70: #{tpu_custom_call.1} parent=63 // pred_check_branch
          %2090 = sbr.rel (%p2088) target = $region72
        $region71: #{tpu_custom_call.1} parent=63 // pred_region
          %s2091 = sand.u32 %s236, 1
          %s2092 = scalar_lea.sflag [#allocation5], %s2091
          %s2093 = sand.u32 %s236, 1
          %s2094 = scalar_lea.vmem [#allocation4], %s2093
          %2095 = dma.done %s2092, 16
        $region72: #{tpu_custom_call.1} parent=63 // pred_fallthru
          _
      $region64: #{tpu_custom_call.1} parent=5 // pred_fallthru
        _
    $region6: #{tpu_custom_call.1} parent=1 // loop_footer
      %s22 = sadd.s32 1, %s18
    $region7: #{tpu_custom_call.1} parent=1 // loop_footer_branch
      %17 = sbr.rel target = $region3
    $region8: #{tpu_custom_call.1} parent=1 // loop_exit
      _
    %2096 = vsyncpa [#allocation5], 1
    %s2097 = scalar_lea.sflag [#allocation5], 1
    %2098 = vsyncpa %s2097, 1

</llo_original>
